<compile_context>
chip_gen: v7x
topology: tpu7x:2x2x1
jax: 0.10.0
libtpu: 0.0.40
codegen_flags: <defaults>
</compile_context>

<pallas_src>
from functools import partial

import numpy as np
import jax
import jax.numpy as jnp
from jax import lax
from jax.experimental import pallas as pl
from jax.experimental.pallas import tpu as pltpu


# ----------------------------- Pallas kernel ------------------------------- #

def _cross_attention_kernel(x_ref, g_ref, wb_ref, mkc_ref, o_ref, *, num_heads):
    """Whole CrossAttention forward for a block of `bb` batches.

    x_ref  : (bb, C, N)        channel-major image tokens (f32)
    g_ref  : (bb, M, Ct+1)     text tokens, last column = 1.0 (bias-folding trick)
    wb_ref : (C, HM+2C+2(Ct+1)+2) packed params:
             [mask_ck | wq*scale | wp | wk_aug | wv_aug | bq*scale | bp]
    mkc_ref: (HM, C)           f32 block-diagonal head mask (= mask_ck.T, built at trace time)
    o_ref  : (bb, C, N)
    """
    bb, C, N = x_ref.shape
    M = g_ref.shape[1]
    Ct1 = g_ref.shape[2]
    HM = mkc_ref.shape[0]
    nh = num_heads

    # ---- unpack the single packed parameter slab (static ref slices, one DMA) ----
    off = 0
    mask_ck = wb_ref[:, off:off + HM]; off += HM                          # (C, HM) f32
    wq_bf = wb_ref[:, off:off + C].astype(jnp.bfloat16); off += C         # scale pre-folded
    wp_bf = wb_ref[:, off:off + C].astype(jnp.bfloat16); off += C
    wk_bf = wb_ref[:, off:off + Ct1].astype(jnp.bfloat16); off += Ct1     # bias in last col
    wv_bf = wb_ref[:, off:off + Ct1].astype(jnp.bfloat16); off += Ct1     # bias in last col
    bq = wb_ref[:, off:off + 1]; off += 1                                 # (C, 1), scale folded
    bp = wb_ref[:, off:off + 1]; off += 1                                 # (C, 1)
    mask_kc = mkc_ref[...]                                                # (HM, C) f32

    # Static unrolled loop over the batches in this grid step (bb is 1 or B).
    for bi in range(bb):
        x_bf = x_ref[bi].astype(jnp.bfloat16)                             # (C, N)
        g_bf = g_ref[bi].astype(jnp.bfloat16)                             # (M, Ct+1)

        # q projection, channel-major; attention scale already folded into wq/bq.
        q = jnp.dot(wq_bf, x_bf, preferred_element_type=jnp.float32) + bq  # (C, N) f32

        # k/v projections; biases come from the ones column of the augmented guidance.
        #   k in (M, C): rows = text tokens;  v in (C, M): rows = channels.
        k_mc = lax.dot_general(g_bf, wk_bf, (((1,), (1,)), ((), ())),
                               preferred_element_type=jnp.float32)         # (M, C)
        v_cm = lax.dot_general(wv_bf, g_bf, (((1,), (1,)), ((), ())),
                               preferred_element_type=jnp.float32)         # (C, M)

        # Block-diagonal "all heads at once" operands built with the trace-time
        # constant masks (no iota / where in the kernel).  The small concats are
        # sublane / lane stacks executed once per grid step.
        k_big = jnp.concatenate([k_mc] * nh, axis=0) * mask_kc             # (HM, C)
        vT_big = jnp.concatenate([v_cm] * nh, axis=1) * mask_ck            # (C, HM)

        # Scores for all heads in one MXU matmul, lane-dense in N.
        s = jnp.dot(k_big.astype(jnp.bfloat16), q.astype(jnp.bfloat16),
                    preferred_element_type=jnp.float32)                    # (HM, N)

        # Per-head numerically-stable softmax over the M text tokens (f32 math).
        # Heads occupy groups of M consecutive rows; a short static loop keeps every
        # op a plain 2-D sublane pattern and the reciprocals per-head (8x smaller
        # than a (C, N) reciprocal).
        p_rows = []
        for h in range(nh):
            sh = s[h * M:(h + 1) * M, :]                                   # (M, N)
            mh = jnp.max(sh, axis=0, keepdims=True)                        # (1, N)
            ph = jnp.exp(sh - mh)
            lh = jnp.sum(ph, axis=0, keepdims=True)                        # (1, N)
            p_rows.append(ph * pl.reciprocal(lh, approx=True))
        p_bf = jnp.concatenate(p_rows, axis=0).astype(jnp.bfloat16)        # (HM, N)

        # Attention output + final projection, straight into channel-major layout.
        o = jnp.dot(vT_big.astype(jnp.bfloat16), p_bf,
                    preferred_element_type=jnp.float32)                    # (C, N)
        out = jnp.dot(wp_bf, o.astype(jnp.bfloat16),
                      preferred_element_type=jnp.float32) + bp             # (C, N)
        o_ref[bi] = out.astype(o_ref.dtype)


# ------------------------------ Module wrapper ------------------------------ #

def init_params(key, dim, text_dim):
    """Weights in torch nn.Linear layout: (out_features, in_features)."""
    k1, k2, k3, k4, k5, k6 = jax.random.split(key, 6)
    s = 0.1
    return {
        "wq":  jax.random.normal(k1, (dim, dim), jnp.float32) * s,
        "bq":  jax.random.normal(k2, (dim,), jnp.float32) * s,
        "wkv": jax.random.normal(k3, (2 * dim, text_dim), jnp.float32) * s,
        "bkv": jax.random.normal(k4, (2 * dim,), jnp.float32) * s,
        "wp":  jax.random.normal(k5, (dim, dim), jnp.float32) * s,
        "bp":  jax.random.normal(k6, (dim,), jnp.float32) * s,
    }


def _head_mask(num_heads, M, C):
    """mask_kc[h*M+m, c] = 1.0 iff channel c belongs to head h (trace-time constant)."""
    hd = C // num_heads
    HM = num_heads * M
    hm = np.arange(HM)
    ch = np.arange(C)
    return ((hm[:, None] // M) == (ch[None, :] // hd)).astype(np.float32)   # (HM, C)


def _default_batch_block(B):
    # v7x has two TensorCores per chip: keep one batch per "parallel" grid step so
    # each core takes one batch.  v5e/v6e are single-TC: one big grid step avoids the
    # second per-step overhead and the second pass over the weight blocks.
    try:
        kind = jax.devices()[0].device_kind.lower()
    except Exception:
        kind = ""
    if ("v7" in kind or "7x" in kind) and B > 1:
        return 1
    return B


def cross_attention_forward(x, guidance, params, num_heads, batch_block=None):
    B, C, H, W = x.shape
    N = H * W
    assert C % num_heads == 0
    scale = (C // num_heads) ** -0.5
    Bg, M, Ct = guidance.shape
    assert Bg == B
    HM = num_heads * M
    Ct1 = Ct + 1

    bb = batch_block if batch_block is not None else _default_batch_block(B)
    if B % bb != 0:
        bb = B

    x_cn = x.reshape(B, C, N)   # free reshape: stays channel-major (no transpose)

    # ---- trace-time parameter packing (tiny XLA ops, outside the kernel) ----
    # Attention scale folded into wq/bq; k/v biases folded into wk/wv via a ones
    # column appended to the guidance; everything with C rows packed into one slab.
    wq_s = params["wq"] * scale
    bq_s = params["bq"] * scale
    wk, bk = params["wkv"][:C], params["bkv"][:C]
    wv, bv = params["wkv"][C:], params["bkv"][C:]
    wk_aug = jnp.concatenate([wk, bk[:, None]], axis=1)            # (C, Ct+1)
    wv_aug = jnp.concatenate([wv, bv[:, None]], axis=1)            # (C, Ct+1)
    mask_kc = jnp.asarray(_head_mask(num_heads, M, C))             # (HM, C)
    mask_ck = mask_kc.T                                            # (C, HM)
    wb = jnp.concatenate(
        [mask_ck, wq_s, params["wp"], wk_aug, wv_aug,
         bq_s[:, None], params["bp"][:, None]], axis=1)            # (C, HM+2C+2(Ct+1)+2)
    g_aug = jnp.concatenate(
        [guidance, jnp.ones((B, M, 1), guidance.dtype)], axis=-1)  # (B, M, Ct+1)
    WBW = HM + 2 * C + 2 * Ct1 + 2

    kern = partial(_cross_attention_kernel, num_heads=num_heads)
    out = pl.pallas_call(
        kern,
        out_shape=jax.ShapeDtypeStruct((B, C, N), x.dtype),
        grid=(B // bb,),
        in_specs=[
            pl.BlockSpec((bb, C, N), lambda b: (b, 0, 0)),      # x (channel-major)
            pl.BlockSpec((bb, M, Ct1), lambda b: (b, 0, 0)),    # guidance + ones column
            pl.BlockSpec((C, WBW), lambda b: (0, 0)),           # packed params + mask_ck
            pl.BlockSpec((HM, C), lambda b: (0, 0)),            # block-diagonal head mask
        ],
        out_specs=pl.BlockSpec((bb, C, N), lambda b: (b, 0, 0)),
        compiler_params=pltpu.CompilerParams(
            dimension_semantics=("parallel",)),
    )(x_cn, g_aug, wb, mask_kc)
    return out.reshape(B, C, H, W)


def cross_attention_reference(x, guidance, params, num_heads):
    """Pure-JAX transcription of the torch forward (for correctness check)."""
    B, C, H, W = x.shape
    N = H * W
    hd = C // num_heads
    scale = hd ** -0.5
    xt = x.reshape(B, C, N).transpose(0, 2, 1)                   # (B, N, C)
    q = xt @ params["wq"].T + params["bq"]
    kv = guidance @ params["wkv"].T + params["bkv"]
    M = guidance.shape[1]
    q = q.reshape(B, N, num_heads, hd).transpose(0, 2, 1, 3)
    kv = kv.reshape(B, M, 2, num_heads, hd).transpose(2, 0, 3, 1, 4)
    k, v = kv[0], kv[1]
    attn = (q @ jnp.swapaxes(k, -2, -1)) * scale
    attn = jax.nn.softmax(attn, axis=-1)
    o = (attn @ v).transpose(0, 2, 1, 3).reshape(B, N, C)
    o = o @ params["wp"].T + params["bp"]
    return o.transpose(0, 2, 1).reshape(B, C, H, W)


if __name__ == "__main__":
    # dim=32 with 8 heads (head_dim=4), image 16x16 -> N=256 tokens,
    # text guidance: 8 tokens of text_dim=16.  attn_drop/proj_drop p=0.0 -> identity.
    B, C, H, W = 2, 32, 16, 16
    num_heads = 8
    text_dim, M = 16, 8

    key = jax.random.PRNGKey(0)
    kx, kg, kp = jax.random.split(key, 3)
    x = jax.random.normal(kx, (B, C, H, W), jnp.float32)
    guidance = jax.random.normal(kg, (B, M, text_dim), jnp.float32)
    params = init_params(kp, C, text_dim)

    out = jax.block_until_ready(cross_attention_forward(x, guidance, params, num_heads))
    assert out.shape == (B, C, H, W), out.shape

    ref = cross_attention_reference(x, guidance, params, num_heads)
    max_err = float(jnp.max(jnp.abs(out - ref)))
    # bf16 MXU feeding (f32 accumulate) + approx reciprocal -> small, bounded deviation.
    assert max_err < 2e-2, max_err

    print("KERNEL_OK")
</pallas_src>

<mosaic_0001>
module attributes {stable_mosaic.version = 11 : i64} {
  func.func @_cross_attention_kernel(%arg0: i32, %arg1: memref<2x32x256xf32, #tpu.memory_space<vmem>>, %arg2: memref<2x8x17xf32, #tpu.memory_space<vmem>>, %arg3: memref<32x164xf32, #tpu.memory_space<vmem>>, %arg4: memref<64x32xf32, #tpu.memory_space<vmem>>, %arg5: memref<2x32x256xf32, #tpu.memory_space<vmem>>) attributes {dimension_semantics = [#tpu.dimension_semantics<parallel>], iteration_bounds = array<i64: 1>, scalar_prefetch = 0 : i64, scratch_operands = 0 : i64, tpu.core_type = #tpu.core_type<tc>, window_params = [{transform_indices = @transform_0, window_bounds = array<i64: 2, 32, 256>}, {transform_indices = @transform_1, window_bounds = array<i64: 2, 8, 17>}, {pipeline_mode = #tpu.pipeline_mode<synchronous>, transform_indices = @transform_2, window_bounds = array<i64: 32, 164>}, {pipeline_mode = #tpu.pipeline_mode<synchronous>, transform_indices = @transform_3, window_bounds = array<i64: 64, 32>}, {transform_indices = @transform_4, window_bounds = array<i64: 2, 32, 256>}]} {
    %c0 = arith.constant 0 : index
    %c0_0 = arith.constant 0 : index
    %0 = vector.load %arg3[%c0, %c0_0] : memref<32x164xf32, #tpu.memory_space<vmem>>, vector<32x64xf32>
    %c0_1 = arith.constant 0 : index
    %c64 = arith.constant 64 : index
    %1 = vector.load %arg3[%c0_1, %c64] : memref<32x164xf32, #tpu.memory_space<vmem>>, vector<32x32xf32>
    %2 = arith.truncf %1 : vector<32x32xf32> to vector<32x32xbf16>
    %c0_2 = arith.constant 0 : index
    %c96 = arith.constant 96 : index
    %3 = vector.load %arg3[%c0_2, %c96] : memref<32x164xf32, #tpu.memory_space<vmem>>, vector<32x32xf32>
    %4 = arith.truncf %3 : vector<32x32xf32> to vector<32x32xbf16>
    %c0_3 = arith.constant 0 : index
    %c128 = arith.constant 128 : index
    %5 = vector.load %arg3[%c0_3, %c128] : memref<32x164xf32, #tpu.memory_space<vmem>>, vector<32x17xf32>
    %6 = arith.truncf %5 : vector<32x17xf32> to vector<32x17xbf16>
    %c0_4 = arith.constant 0 : index
    %c145 = arith.constant 145 : index
    %7 = vector.load %arg3[%c0_4, %c145] : memref<32x164xf32, #tpu.memory_space<vmem>>, vector<32x17xf32>
    %8 = arith.truncf %7 : vector<32x17xf32> to vector<32x17xbf16>
    %c0_5 = arith.constant 0 : index
    %c162 = arith.constant 162 : index
    %9 = vector.load %arg3[%c0_5, %c162] : memref<32x164xf32, #tpu.memory_space<vmem>>, vector<32x1xf32>
    %c0_6 = arith.constant 0 : index
    %c163 = arith.constant 163 : index
    %10 = vector.load %arg3[%c0_6, %c163] : memref<32x164xf32, #tpu.memory_space<vmem>>, vector<32x1xf32>
    %c0_7 = arith.constant 0 : index
    %c0_8 = arith.constant 0 : index
    %11 = vector.load %arg4[%c0_7, %c0_8] : memref<64x32xf32, #tpu.memory_space<vmem>>, vector<64x32xf32>
    %c0_9 = arith.constant 0 : index
    %c0_10 = arith.constant 0 : index
    %c0_11 = arith.constant 0 : index
    %12 = vector.load %arg1[%c0_9, %c0_10, %c0_11] : memref<2x32x256xf32, #tpu.memory_space<vmem>>, vector<1x32x256xf32>
    %13 = vector.shape_cast %12 : vector<1x32x256xf32> to vector<32x256xf32>
    %14 = arith.truncf %13 : vector<32x256xf32> to vector<32x256xbf16>
    %c0_12 = arith.constant 0 : index
    %c0_13 = arith.constant 0 : index
    %c0_14 = arith.constant 0 : index
    %15 = vector.load %arg2[%c0_12, %c0_13, %c0_14] : memref<2x8x17xf32, #tpu.memory_space<vmem>>, vector<1x8x17xf32>
    %16 = vector.shape_cast %15 : vector<1x8x17xf32> to vector<8x17xf32>
    %17 = arith.truncf %16 : vector<8x17xf32> to vector<8x17xbf16>
    %cst = arith.constant dense<0.000000e+00> : vector<32x256xf32>
    %18 = tpu.matmul %2, %14, %cst {dimension_numbers = #tpu.dot_dimension_numbers<[1], [0], [0], [1], [0, 0, 1, 1], [], []>} : vector<32x32xbf16>, vector<32x256xbf16>, vector<32x256xf32> -> vector<32x256xf32>
    %19 = vector.broadcast %9 : vector<32x1xf32> to vector<32x256xf32>
    %20 = arith.addf %18, %19 : vector<32x256xf32>
    %cst_15 = arith.constant dense<0.000000e+00> : vector<8x32xf32>
    %21 = tpu.matmul %17, %6, %cst_15 {dimension_numbers = #tpu.dot_dimension_numbers<[1], [1], [0], [0], [0, 0, 1, 0], [], []>} : vector<8x17xbf16>, vector<32x17xbf16>, vector<8x32xf32> -> vector<8x32xf32>
    %cst_16 = arith.constant dense<0.000000e+00> : vector<32x8xf32>
    %22 = tpu.matmul %8, %17, %cst_16 {dimension_numbers = #tpu.dot_dimension_numbers<[1], [1], [0], [0], [0, 0, 1, 0], [], []>} : vector<32x17xbf16>, vector<8x17xbf16>, vector<32x8xf32> -> vector<32x8xf32>
    %23 = tpu.concatenate %21, %21, %21, %21, %21, %21, %21, %21 in 0 : vector<8x32xf32>, vector<8x32xf32>, vector<8x32xf32>, vector<8x32xf32>, vector<8x32xf32>, vector<8x32xf32>, vector<8x32xf32>, vector<8x32xf32> -> vector<64x32xf32>
    %24 = arith.mulf %23, %11 : vector<64x32xf32>
    %25 = tpu.concatenate %22, %22, %22, %22, %22, %22, %22, %22 in 1 : vector<32x8xf32>, vector<32x8xf32>, vector<32x8xf32>, vector<32x8xf32>, vector<32x8xf32>, vector<32x8xf32>, vector<32x8xf32>, vector<32x8xf32> -> vector<32x64xf32>
    %26 = arith.mulf %25, %0 : vector<32x64xf32>
    %27 = arith.truncf %24 : vector<64x32xf32> to vector<64x32xbf16>
    %28 = arith.truncf %20 : vector<32x256xf32> to vector<32x256xbf16>
    %cst_17 = arith.constant dense<0.000000e+00> : vector<64x256xf32>
    %29 = tpu.matmul %27, %28, %cst_17 {dimension_numbers = #tpu.dot_dimension_numbers<[1], [0], [0], [1], [0, 0, 1, 1], [], []>} : vector<64x32xbf16>, vector<32x256xbf16>, vector<64x256xf32> -> vector<64x256xf32>
    %30 = vector.extract_strided_slice %29 {offsets = [0, 0], sizes = [8, 256], strides = [1, 1]} : vector<64x256xf32> to vector<8x256xf32>
    %cst_18 = arith.constant dense<0xFF800000> : vector<256xf32>
    %31 = vector.multi_reduction <maximumf>, %30, %cst_18 [0] : vector<8x256xf32> to vector<256xf32>
    %32 = vector.shape_cast %31 : vector<256xf32> to vector<1x256xf32>
    %33 = vector.broadcast %32 : vector<1x256xf32> to vector<8x256xf32>
    %34 = arith.subf %30, %33 : vector<8x256xf32>
    %35 = math.exp %34 : vector<8x256xf32>
    %cst_19 = arith.constant dense<0.000000e+00> : vector<256xf32>
    %36 = vector.multi_reduction <add>, %35, %cst_19 [0] : vector<8x256xf32> to vector<256xf32>
    %37 = vector.shape_cast %36 : vector<256xf32> to vector<1x256xf32>
    %38 = tpu.reciprocal %37 {approx = true} : vector<1x256xf32> -> vector<1x256xf32>
    %39 = vector.broadcast %38 : vector<1x256xf32> to vector<8x256xf32>
    %40 = arith.mulf %35, %39 : vector<8x256xf32>
    %41 = vector.extract_strided_slice %29 {offsets = [8, 0], sizes = [8, 256], strides = [1, 1]} : vector<64x256xf32> to vector<8x256xf32>
    %cst_20 = arith.constant dense<0xFF800000> : vector<256xf32>
    %42 = vector.multi_reduction <maximumf>, %41, %cst_20 [0] : vector<8x256xf32> to vector<256xf32>
    %43 = vector.shape_cast %42 : vector<256xf32> to vector<1x256xf32>
    %44 = vector.broadcast %43 : vector<1x256xf32> to vector<8x256xf32>
    %45 = arith.subf %41, %44 : vector<8x256xf32>
    %46 = math.exp %45 : vector<8x256xf32>
    %cst_21 = arith.constant dense<0.000000e+00> : vector<256xf32>
    %47 = vector.multi_reduction <add>, %46, %cst_21 [0] : vector<8x256xf32> to vector<256xf32>
    %48 = vector.shape_cast %47 : vector<256xf32> to vector<1x256xf32>
    %49 = tpu.reciprocal %48 {approx = true} : vector<1x256xf32> -> vector<1x256xf32>
    %50 = vector.broadcast %49 : vector<1x256xf32> to vector<8x256xf32>
    %51 = arith.mulf %46, %50 : vector<8x256xf32>
    %52 = vector.extract_strided_slice %29 {offsets = [16, 0], sizes = [8, 256], strides = [1, 1]} : vector<64x256xf32> to vector<8x256xf32>
    %cst_22 = arith.constant dense<0xFF800000> : vector<256xf32>
    %53 = vector.multi_reduction <maximumf>, %52, %cst_22 [0] : vector<8x256xf32> to vector<256xf32>
    %54 = vector.shape_cast %53 : vector<256xf32> to vector<1x256xf32>
    %55 = vector.broadcast %54 : vector<1x256xf32> to vector<8x256xf32>
    %56 = arith.subf %52, %55 : vector<8x256xf32>
    %57 = math.exp %56 : vector<8x256xf32>
    %cst_23 = arith.constant dense<0.000000e+00> : vector<256xf32>
    %58 = vector.multi_reduction <add>, %57, %cst_23 [0] : vector<8x256xf32> to vector<256xf32>
    %59 = vector.shape_cast %58 : vector<256xf32> to vector<1x256xf32>
    %60 = tpu.reciprocal %59 {approx = true} : vector<1x256xf32> -> vector<1x256xf32>
    %61 = vector.broadcast %60 : vector<1x256xf32> to vector<8x256xf32>
    %62 = arith.mulf %57, %61 : vector<8x256xf32>
    %63 = vector.extract_strided_slice %29 {offsets = [24, 0], sizes = [8, 256], strides = [1, 1]} : vector<64x256xf32> to vector<8x256xf32>
    %cst_24 = arith.constant dense<0xFF800000> : vector<256xf32>
    %64 = vector.multi_reduction <maximumf>, %63, %cst_24 [0] : vector<8x256xf32> to vector<256xf32>
    %65 = vector.shape_cast %64 : vector<256xf32> to vector<1x256xf32>
    %66 = vector.broadcast %65 : vector<1x256xf32> to vector<8x256xf32>
    %67 = arith.subf %63, %66 : vector<8x256xf32>
    %68 = math.exp %67 : vector<8x256xf32>
    %cst_25 = arith.constant dense<0.000000e+00> : vector<256xf32>
    %69 = vector.multi_reduction <add>, %68, %cst_25 [0] : vector<8x256xf32> to vector<256xf32>
    %70 = vector.shape_cast %69 : vector<256xf32> to vector<1x256xf32>
    %71 = tpu.reciprocal %70 {approx = true} : vector<1x256xf32> -> vector<1x256xf32>
    %72 = vector.broadcast %71 : vector<1x256xf32> to vector<8x256xf32>
    %73 = arith.mulf %68, %72 : vector<8x256xf32>
    %74 = vector.extract_strided_slice %29 {offsets = [32, 0], sizes = [8, 256], strides = [1, 1]} : vector<64x256xf32> to vector<8x256xf32>
    %cst_26 = arith.constant dense<0xFF800000> : vector<256xf32>
    %75 = vector.multi_reduction <maximumf>, %74, %cst_26 [0] : vector<8x256xf32> to vector<256xf32>
    %76 = vector.shape_cast %75 : vector<256xf32> to vector<1x256xf32>
    %77 = vector.broadcast %76 : vector<1x256xf32> to vector<8x256xf32>
    %78 = arith.subf %74, %77 : vector<8x256xf32>
    %79 = math.exp %78 : vector<8x256xf32>
    %cst_27 = arith.constant dense<0.000000e+00> : vector<256xf32>
    %80 = vector.multi_reduction <add>, %79, %cst_27 [0] : vector<8x256xf32> to vector<256xf32>
    %81 = vector.shape_cast %80 : vector<256xf32> to vector<1x256xf32>
    %82 = tpu.reciprocal %81 {approx = true} : vector<1x256xf32> -> vector<1x256xf32>
    %83 = vector.broadcast %82 : vector<1x256xf32> to vector<8x256xf32>
    %84 = arith.mulf %79, %83 : vector<8x256xf32>
    %85 = vector.extract_strided_slice %29 {offsets = [40, 0], sizes = [8, 256], strides = [1, 1]} : vector<64x256xf32> to vector<8x256xf32>
    %cst_28 = arith.constant dense<0xFF800000> : vector<256xf32>
    %86 = vector.multi_reduction <maximumf>, %85, %cst_28 [0] : vector<8x256xf32> to vector<256xf32>
    %87 = vector.shape_cast %86 : vector<256xf32> to vector<1x256xf32>
    %88 = vector.broadcast %87 : vector<1x256xf32> to vector<8x256xf32>
    %89 = arith.subf %85, %88 : vector<8x256xf32>
    %90 = math.exp %89 : vector<8x256xf32>
    %cst_29 = arith.constant dense<0.000000e+00> : vector<256xf32>
    %91 = vector.multi_reduction <add>, %90, %cst_29 [0] : vector<8x256xf32> to vector<256xf32>
    %92 = vector.shape_cast %91 : vector<256xf32> to vector<1x256xf32>
    %93 = tpu.reciprocal %92 {approx = true} : vector<1x256xf32> -> vector<1x256xf32>
    %94 = vector.broadcast %93 : vector<1x256xf32> to vector<8x256xf32>
    %95 = arith.mulf %90, %94 : vector<8x256xf32>
    %96 = vector.extract_strided_slice %29 {offsets = [48, 0], sizes = [8, 256], strides = [1, 1]} : vector<64x256xf32> to vector<8x256xf32>
    %cst_30 = arith.constant dense<0xFF800000> : vector<256xf32>
    %97 = vector.multi_reduction <maximumf>, %96, %cst_30 [0] : vector<8x256xf32> to vector<256xf32>
    %98 = vector.shape_cast %97 : vector<256xf32> to vector<1x256xf32>
    %99 = vector.broadcast %98 : vector<1x256xf32> to vector<8x256xf32>
    %100 = arith.subf %96, %99 : vector<8x256xf32>
    %101 = math.exp %100 : vector<8x256xf32>
    %cst_31 = arith.constant dense<0.000000e+00> : vector<256xf32>
    %102 = vector.multi_reduction <add>, %101, %cst_31 [0] : vector<8x256xf32> to vector<256xf32>
    %103 = vector.shape_cast %102 : vector<256xf32> to vector<1x256xf32>
    %104 = tpu.reciprocal %103 {approx = true} : vector<1x256xf32> -> vector<1x256xf32>
    %105 = vector.broadcast %104 : vector<1x256xf32> to vector<8x256xf32>
    %106 = arith.mulf %101, %105 : vector<8x256xf32>
    %107 = vector.extract_strided_slice %29 {offsets = [56, 0], sizes = [8, 256], strides = [1, 1]} : vector<64x256xf32> to vector<8x256xf32>
    %cst_32 = arith.constant dense<0xFF800000> : vector<256xf32>
    %108 = vector.multi_reduction <maximumf>, %107, %cst_32 [0] : vector<8x256xf32> to vector<256xf32>
    %109 = vector.shape_cast %108 : vector<256xf32> to vector<1x256xf32>
    %110 = vector.broadcast %109 : vector<1x256xf32> to vector<8x256xf32>
    %111 = arith.subf %107, %110 : vector<8x256xf32>
    %112 = math.exp %111 : vector<8x256xf32>
    %cst_33 = arith.constant dense<0.000000e+00> : vector<256xf32>
    %113 = vector.multi_reduction <add>, %112, %cst_33 [0] : vector<8x256xf32> to vector<256xf32>
    %114 = vector.shape_cast %113 : vector<256xf32> to vector<1x256xf32>
    %115 = tpu.reciprocal %114 {approx = true} : vector<1x256xf32> -> vector<1x256xf32>
    %116 = vector.broadcast %115 : vector<1x256xf32> to vector<8x256xf32>
    %117 = arith.mulf %112, %116 : vector<8x256xf32>
    %118 = tpu.concatenate %40, %51, %62, %73, %84, %95, %106, %117 in 0 : vector<8x256xf32>, vector<8x256xf32>, vector<8x256xf32>, vector<8x256xf32>, vector<8x256xf32>, vector<8x256xf32>, vector<8x256xf32>, vector<8x256xf32> -> vector<64x256xf32>
    %119 = arith.truncf %118 : vector<64x256xf32> to vector<64x256xbf16>
    %120 = arith.truncf %26 : vector<32x64xf32> to vector<32x64xbf16>
    %cst_34 = arith.constant dense<0.000000e+00> : vector<32x256xf32>
    %121 = tpu.matmul %120, %119, %cst_34 {dimension_numbers = #tpu.dot_dimension_numbers<[1], [0], [0], [1], [0, 0, 1, 1], [], []>} : vector<32x64xbf16>, vector<64x256xbf16>, vector<32x256xf32> -> vector<32x256xf32>
    %122 = arith.truncf %121 : vector<32x256xf32> to vector<32x256xbf16>
    %cst_35 = arith.constant dense<0.000000e+00> : vector<32x256xf32>
    %123 = tpu.matmul %4, %122, %cst_35 {dimension_numbers = #tpu.dot_dimension_numbers<[1], [0], [0], [1], [0, 0, 1, 1], [], []>} : vector<32x32xbf16>, vector<32x256xbf16>, vector<32x256xf32> -> vector<32x256xf32>
    %124 = vector.broadcast %10 : vector<32x1xf32> to vector<32x256xf32>
    %125 = arith.addf %123, %124 : vector<32x256xf32>
    %c0_36 = arith.constant 0 : index
    %c0_37 = arith.constant 0 : index
    %c0_38 = arith.constant 0 : index
    %126 = vector.load %arg5[%c0_36, %c0_37, %c0_38] : memref<2x32x256xf32, #tpu.memory_space<vmem>>, vector<1x32x256xf32>
    %127 = vector.shape_cast %126 : vector<1x32x256xf32> to vector<32x256xf32>
    %128 = vector.shape_cast %125 : vector<32x256xf32> to vector<1x32x256xf32>
    tpu.vector_store %arg5[%c0_36, %c0_37, %c0_38], %128 {strides = array<i32>} : memref<2x32x256xf32, #tpu.memory_space<vmem>>, vector<1x32x256xf32>,
    %c1 = arith.constant 1 : index
    %c0_39 = arith.constant 0 : index
    %c0_40 = arith.constant 0 : index
    %129 = vector.load %arg1[%c1, %c0_39, %c0_40] : memref<2x32x256xf32, #tpu.memory_space<vmem>>, vector<1x32x256xf32>
    %130 = vector.shape_cast %129 : vector<1x32x256xf32> to vector<32x256xf32>
    %131 = arith.truncf %130 : vector<32x256xf32> to vector<32x256xbf16>
    %c1_41 = arith.constant 1 : index
    %c0_42 = arith.constant 0 : index
    %c0_43 = arith.constant 0 : index
    %132 = vector.load %arg2[%c1_41, %c0_42, %c0_43] : memref<2x8x17xf32, #tpu.memory_space<vmem>>, vector<1x8x17xf32>
    %133 = vector.shape_cast %132 : vector<1x8x17xf32> to vector<8x17xf32>
    %134 = arith.truncf %133 : vector<8x17xf32> to vector<8x17xbf16>
    %cst_44 = arith.constant dense<0.000000e+00> : vector<32x256xf32>
    %135 = tpu.matmul %2, %131, %cst_44 {dimension_numbers = #tpu.dot_dimension_numbers<[1], [0], [0], [1], [0, 0, 1, 1], [], []>} : vector<32x32xbf16>, vector<32x256xbf16>, vector<32x256xf32> -> vector<32x256xf32>
    %136 = vector.broadcast %9 : vector<32x1xf32> to vector<32x256xf32>
    %137 = arith.addf %135, %136 : vector<32x256xf32>
    %cst_45 = arith.constant dense<0.000000e+00> : vector<8x32xf32>
    %138 = tpu.matmul %134, %6, %cst_45 {dimension_numbers = #tpu.dot_dimension_numbers<[1], [1], [0], [0], [0, 0, 1, 0], [], []>} : vector<8x17xbf16>, vector<32x17xbf16>, vector<8x32xf32> -> vector<8x32xf32>
    %cst_46 = arith.constant dense<0.000000e+00> : vector<32x8xf32>
    %139 = tpu.matmul %8, %134, %cst_46 {dimension_numbers = #tpu.dot_dimension_numbers<[1], [1], [0], [0], [0, 0, 1, 0], [], []>} : vector<32x17xbf16>, vector<8x17xbf16>, vector<32x8xf32> -> vector<32x8xf32>
    %140 = tpu.concatenate %138, %138, %138, %138, %138, %138, %138, %138 in 0 : vector<8x32xf32>, vector<8x32xf32>, vector<8x32xf32>, vector<8x32xf32>, vector<8x32xf32>, vector<8x32xf32>, vector<8x32xf32>, vector<8x32xf32> -> vector<64x32xf32>
    %141 = arith.mulf %140, %11 : vector<64x32xf32>
    %142 = tpu.concatenate %139, %139, %139, %139, %139, %139, %139, %139 in 1 : vector<32x8xf32>, vector<32x8xf32>, vector<32x8xf32>, vector<32x8xf32>, vector<32x8xf32>, vector<32x8xf32>, vector<32x8xf32>, vector<32x8xf32> -> vector<32x64xf32>
    %143 = arith.mulf %142, %0 : vector<32x64xf32>
    %144 = arith.truncf %141 : vector<64x32xf32> to vector<64x32xbf16>
    %145 = arith.truncf %137 : vector<32x256xf32> to vector<32x256xbf16>
    %cst_47 = arith.constant dense<0.000000e+00> : vector<64x256xf32>
    %146 = tpu.matmul %144, %145, %cst_47 {dimension_numbers = #tpu.dot_dimension_numbers<[1], [0], [0], [1], [0, 0, 1, 1], [], []>} : vector<64x32xbf16>, vector<32x256xbf16>, vector<64x256xf32> -> vector<64x256xf32>
    %147 = vector.extract_strided_slice %146 {offsets = [0, 0], sizes = [8, 256], strides = [1, 1]} : vector<64x256xf32> to vector<8x256xf32>
    %cst_48 = arith.constant dense<0xFF800000> : vector<256xf32>
    %148 = vector.multi_reduction <maximumf>, %147, %cst_48 [0] : vector<8x256xf32> to vector<256xf32>
    %149 = vector.shape_cast %148 : vector<256xf32> to vector<1x256xf32>
    %150 = vector.broadcast %149 : vector<1x256xf32> to vector<8x256xf32>
    %151 = arith.subf %147, %150 : vector<8x256xf32>
    %152 = math.exp %151 : vector<8x256xf32>
    %cst_49 = arith.constant dense<0.000000e+00> : vector<256xf32>
    %153 = vector.multi_reduction <add>, %152, %cst_49 [0] : vector<8x256xf32> to vector<256xf32>
    %154 = vector.shape_cast %153 : vector<256xf32> to vector<1x256xf32>
    %155 = tpu.reciprocal %154 {approx = true} : vector<1x256xf32> -> vector<1x256xf32>
    %156 = vector.broadcast %155 : vector<1x256xf32> to vector<8x256xf32>
    %157 = arith.mulf %152, %156 : vector<8x256xf32>
    %158 = vector.extract_strided_slice %146 {offsets = [8, 0], sizes = [8, 256], strides = [1, 1]} : vector<64x256xf32> to vector<8x256xf32>
    %cst_50 = arith.constant dense<0xFF800000> : vector<256xf32>
    %159 = vector.multi_reduction <maximumf>, %158, %cst_50 [0] : vector<8x256xf32> to vector<256xf32>
    %160 = vector.shape_cast %159 : vector<256xf32> to vector<1x256xf32>
    %161 = vector.broadcast %160 : vector<1x256xf32> to vector<8x256xf32>
    %162 = arith.subf %158, %161 : vector<8x256xf32>
    %163 = math.exp %162 : vector<8x256xf32>
    %cst_51 = arith.constant dense<0.000000e+00> : vector<256xf32>
    %164 = vector.multi_reduction <add>, %163, %cst_51 [0] : vector<8x256xf32> to vector<256xf32>
    %165 = vector.shape_cast %164 : vector<256xf32> to vector<1x256xf32>
    %166 = tpu.reciprocal %165 {approx = true} : vector<1x256xf32> -> vector<1x256xf32>
    %167 = vector.broadcast %166 : vector<1x256xf32> to vector<8x256xf32>
    %168 = arith.mulf %163, %167 : vector<8x256xf32>
    %169 = vector.extract_strided_slice %146 {offsets = [16, 0], sizes = [8, 256], strides = [1, 1]} : vector<64x256xf32> to vector<8x256xf32>
    %cst_52 = arith.constant dense<0xFF800000> : vector<256xf32>
    %170 = vector.multi_reduction <maximumf>, %169, %cst_52 [0] : vector<8x256xf32> to vector<256xf32>
    %171 = vector.shape_cast %170 : vector<256xf32> to vector<1x256xf32>
    %172 = vector.broadcast %171 : vector<1x256xf32> to vector<8x256xf32>
    %173 = arith.subf %169, %172 : vector<8x256xf32>
    %174 = math.exp %173 : vector<8x256xf32>
    %cst_53 = arith.constant dense<0.000000e+00> : vector<256xf32>
    %175 = vector.multi_reduction <add>, %174, %cst_53 [0] : vector<8x256xf32> to vector<256xf32>
    %176 = vector.shape_cast %175 : vector<256xf32> to vector<1x256xf32>
    %177 = tpu.reciprocal %176 {approx = true} : vector<1x256xf32> -> vector<1x256xf32>
    %178 = vector.broadcast %177 : vector<1x256xf32> to vector<8x256xf32>
    %179 = arith.mulf %174, %178 : vector<8x256xf32>
    %180 = vector.extract_strided_slice %146 {offsets = [24, 0], sizes = [8, 256], strides = [1, 1]} : vector<64x256xf32> to vector<8x256xf32>
    %cst_54 = arith.constant dense<0xFF800000> : vector<256xf32>
    %181 = vector.multi_reduction <maximumf>, %180, %cst_54 [0] : vector<8x256xf32> to vector<256xf32>
    %182 = vector.shape_cast %181 : vector<256xf32> to vector<1x256xf32>
    %183 = vector.broadcast %182 : vector<1x256xf32> to vector<8x256xf32>
    %184 = arith.subf %180, %183 : vector<8x256xf32>
    %185 = math.exp %184 : vector<8x256xf32>
    %cst_55 = arith.constant dense<0.000000e+00> : vector<256xf32>
    %186 = vector.multi_reduction <add>, %185, %cst_55 [0] : vector<8x256xf32> to vector<256xf32>
    %187 = vector.shape_cast %186 : vector<256xf32> to vector<1x256xf32>
    %188 = tpu.reciprocal %187 {approx = true} : vector<1x256xf32> -> vector<1x256xf32>
    %189 = vector.broadcast %188 : vector<1x256xf32> to vector<8x256xf32>
    %190 = arith.mulf %185, %189 : vector<8x256xf32>
    %191 = vector.extract_strided_slice %146 {offsets = [32, 0], sizes = [8, 256], strides = [1, 1]} : vector<64x256xf32> to vector<8x256xf32>
    %cst_56 = arith.constant dense<0xFF800000> : vector<256xf32>
    %192 = vector.multi_reduction <maximumf>, %191, %cst_56 [0] : vector<8x256xf32> to vector<256xf32>
    %193 = vector.shape_cast %192 : vector<256xf32> to vector<1x256xf32>
    %194 = vector.broadcast %193 : vector<1x256xf32> to vector<8x256xf32>
    %195 = arith.subf %191, %194 : vector<8x256xf32>
    %196 = math.exp %195 : vector<8x256xf32>
    %cst_57 = arith.constant dense<0.000000e+00> : vector<256xf32>
    %197 = vector.multi_reduction <add>, %196, %cst_57 [0] : vector<8x256xf32> to vector<256xf32>
    %198 = vector.shape_cast %197 : vector<256xf32> to vector<1x256xf32>
    %199 = tpu.reciprocal %198 {approx = true} : vector<1x256xf32> -> vector<1x256xf32>
    %200 = vector.broadcast %199 : vector<1x256xf32> to vector<8x256xf32>
    %201 = arith.mulf %196, %200 : vector<8x256xf32>
    %202 = vector.extract_strided_slice %146 {offsets = [40, 0], sizes = [8, 256], strides = [1, 1]} : vector<64x256xf32> to vector<8x256xf32>
    %cst_58 = arith.constant dense<0xFF800000> : vector<256xf32>
    %203 = vector.multi_reduction <maximumf>, %202, %cst_58 [0] : vector<8x256xf32> to vector<256xf32>
    %204 = vector.shape_cast %203 : vector<256xf32> to vector<1x256xf32>
    %205 = vector.broadcast %204 : vector<1x256xf32> to vector<8x256xf32>
    %206 = arith.subf %202, %205 : vector<8x256xf32>
    %207 = math.exp %206 : vector<8x256xf32>
    %cst_59 = arith.constant dense<0.000000e+00> : vector<256xf32>
    %208 = vector.multi_reduction <add>, %207, %cst_59 [0] : vector<8x256xf32> to vector<256xf32>
    %209 = vector.shape_cast %208 : vector<256xf32> to vector<1x256xf32>
    %210 = tpu.reciprocal %209 {approx = true} : vector<1x256xf32> -> vector<1x256xf32>
    %211 = vector.broadcast %210 : vector<1x256xf32> to vector<8x256xf32>
    %212 = arith.mulf %207, %211 : vector<8x256xf32>
    %213 = vector.extract_strided_slice %146 {offsets = [48, 0], sizes = [8, 256], strides = [1, 1]} : vector<64x256xf32> to vector<8x256xf32>
    %cst_60 = arith.constant dense<0xFF800000> : vector<256xf32>
    %214 = vector.multi_reduction <maximumf>, %213, %cst_60 [0] : vector<8x256xf32> to vector<256xf32>
    %215 = vector.shape_cast %214 : vector<256xf32> to vector<1x256xf32>
    %216 = vector.broadcast %215 : vector<1x256xf32> to vector<8x256xf32>
    %217 = arith.subf %213, %216 : vector<8x256xf32>
    %218 = math.exp %217 : vector<8x256xf32>
    %cst_61 = arith.constant dense<0.000000e+00> : vector<256xf32>
    %219 = vector.multi_reduction <add>, %218, %cst_61 [0] : vector<8x256xf32> to vector<256xf32>
    %220 = vector.shape_cast %219 : vector<256xf32> to vector<1x256xf32>
    %221 = tpu.reciprocal %220 {approx = true} : vector<1x256xf32> -> vector<1x256xf32>
    %222 = vector.broadcast %221 : vector<1x256xf32> to vector<8x256xf32>
    %223 = arith.mulf %218, %222 : vector<8x256xf32>
    %224 = vector.extract_strided_slice %146 {offsets = [56, 0], sizes = [8, 256], strides = [1, 1]} : vector<64x256xf32> to vector<8x256xf32>
    %cst_62 = arith.constant dense<0xFF800000> : vector<256xf32>
    %225 = vector.multi_reduction <maximumf>, %224, %cst_62 [0] : vector<8x256xf32> to vector<256xf32>
    %226 = vector.shape_cast %225 : vector<256xf32> to vector<1x256xf32>
    %227 = vector.broadcast %226 : vector<1x256xf32> to vector<8x256xf32>
    %228 = arith.subf %224, %227 : vector<8x256xf32>
    %229 = math.exp %228 : vector<8x256xf32>
    %cst_63 = arith.constant dense<0.000000e+00> : vector<256xf32>
    %230 = vector.multi_reduction <add>, %229, %cst_63 [0] : vector<8x256xf32> to vector<256xf32>
    %231 = vector.shape_cast %230 : vector<256xf32> to vector<1x256xf32>
    %232 = tpu.reciprocal %231 {approx = true} : vector<1x256xf32> -> vector<1x256xf32>
    %233 = vector.broadcast %232 : vector<1x256xf32> to vector<8x256xf32>
    %234 = arith.mulf %229, %233 : vector<8x256xf32>
    %235 = tpu.concatenate %157, %168, %179, %190, %201, %212, %223, %234 in 0 : vector<8x256xf32>, vector<8x256xf32>, vector<8x256xf32>, vector<8x256xf32>, vector<8x256xf32>, vector<8x256xf32>, vector<8x256xf32>, vector<8x256xf32> -> vector<64x256xf32>
    %236 = arith.truncf %235 : vector<64x256xf32> to vector<64x256xbf16>
    %237 = arith.truncf %143 : vector<32x64xf32> to vector<32x64xbf16>
    %cst_64 = arith.constant dense<0.000000e+00> : vector<32x256xf32>
    %238 = tpu.matmul %237, %236, %cst_64 {dimension_numbers = #tpu.dot_dimension_numbers<[1], [0], [0], [1], [0, 0, 1, 1], [], []>} : vector<32x64xbf16>, vector<64x256xbf16>, vector<32x256xf32> -> vector<32x256xf32>
    %239 = arith.truncf %238 : vector<32x256xf32> to vector<32x256xbf16>
    %cst_65 = arith.constant dense<0.000000e+00> : vector<32x256xf32>
    %240 = tpu.matmul %4, %239, %cst_65 {dimension_numbers = #tpu.dot_dimension_numbers<[1], [0], [0], [1], [0, 0, 1, 1], [], []>} : vector<32x32xbf16>, vector<32x256xbf16>, vector<32x256xf32> -> vector<32x256xf32>
    %241 = vector.broadcast %10 : vector<32x1xf32> to vector<32x256xf32>
    %242 = arith.addf %240, %241 : vector<32x256xf32>
    %c1_66 = arith.constant 1 : index
    %c0_67 = arith.constant 0 : index
    %c0_68 = arith.constant 0 : index
    %243 = vector.load %arg5[%c1_66, %c0_67, %c0_68] : memref<2x32x256xf32, #tpu.memory_space<vmem>>, vector<1x32x256xf32>
    %244 = vector.shape_cast %243 : vector<1x32x256xf32> to vector<32x256xf32>
    %245 = vector.shape_cast %242 : vector<32x256xf32> to vector<1x32x256xf32>
    tpu.vector_store %arg5[%c1_66, %c0_67, %c0_68], %245 {strides = array<i32>} : memref<2x32x256xf32, #tpu.memory_space<vmem>>, vector<1x32x256xf32>,
    return
  }
  func.func @transform_0(%arg0: i32) -> (i32, i32, i32) {
    %c0_i32 = arith.constant 0 : i32
    %c0_i32_0 = arith.constant 0 : i32
    %c0_i32_1 = arith.constant 0 : i32
    return %arg0, %c0_i32, %c0_i32_0 : i32, i32, i32
  }
  func.func @transform_1(%arg0: i32) -> (i32, i32, i32) {
    %c0_i32 = arith.constant 0 : i32
    %c0_i32_0 = arith.constant 0 : i32
    %c0_i32_1 = arith.constant 0 : i32
    return %arg0, %c0_i32, %c0_i32_0 : i32, i32, i32
  }
  func.func @transform_2(%arg0: i32) -> (i32, i32) {
    %c0_i32 = arith.constant 0 : i32
    %c0_i32_0 = arith.constant 0 : i32
    %c0_i32_1 = arith.constant 0 : i32
    return %c0_i32, %c0_i32_0 : i32, i32
  }
  func.func @transform_3(%arg0: i32) -> (i32, i32) {
    %c0_i32 = arith.constant 0 : i32
    %c0_i32_0 = arith.constant 0 : i32
    %c0_i32_1 = arith.constant 0 : i32
    return %c0_i32, %c0_i32_0 : i32, i32
  }
  func.func @transform_4(%arg0: i32) -> (i32, i32, i32) {
    %c0_i32 = arith.constant 0 : i32
    %c0_i32_0 = arith.constant 0 : i32
    %c0_i32_1 = arith.constant 0 : i32
    return %arg0, %c0_i32, %c0_i32_0 : i32, i32, i32
  }
}

</mosaic_0001>

<llo_original>
// kernel: tpu_custom_call.1
$region0: #{tpu_custom_call.1}
  #allocation0 [shape = 'u32[]', space=smem, size = 0x4, offset = 0x4, fixed_abs, tag = 'smem constant byte address 0x4 - core index']
  #allocation1 [shape = 'u32[144,128]{1,0:T(1,128)}', space=vmem, size = 0x12000, scoped, tag = 'internal scratch']
  %s0 = inlined_call_operand.hbm [shape: f32[2,32,256], index: 0, kind: input, shape index: {}]
  %s1 = inlined_call_operand.vmem [shape: f32[2,8,17], index: 1, kind: input, shape index: {}]
  %s2 = inlined_call_operand.vmem [shape: f32[32,164], index: 2, kind: input, shape index: {}]
  %s3 = inlined_call_operand.vmem [shape: f32[64,32], index: 3, kind: input, shape index: {}]
  %s4 = inlined_call_operand.hbm [shape: f32[2,32,256], index: 4, kind: output, shape index: {}]
  %s5 = sld [smem:[#allocation0]]
  $region30: #{tpu_custom_call.1} parent=0
    _
  %s7 = ssub.s32 1, %s5
  %s8 = scalar_select 0, %s7, %s5
  $region1: #{tpu_custom_call.1} parent=0
    #allocation2 [shape = 'u8[65536]{0}', space=vmem, size = 0x10000, scoped, tag = 'input window, operand 0, single buffered']
    #allocation3 [shape = 's32[1]{0}', space=sflag, size = 0x4, scoped, tag = 'scoped memory for tpu_custom_call.1']
    #allocation4 [shape = 's32[1]{0}', space=sflag, size = 0x4, scoped, tag = 'scoped memory for tpu_custom_call.1']
    #allocation5 [shape = 'u8[65536]{0}', space=vmem, size = 0x10000, scoped, tag = 'output window, operand 0, single buffered']
    %9 = vsyncpa [#allocation3], 0
    %10 = vsyncpa [#allocation4], 0
    // Predicated region
    $region2: #{tpu_custom_call.1} parent=1 // pred_check
      _
    $region3: #{tpu_custom_call.1} parent=1 // pred_check_branch
      %12 = sbr.rel (0) target = $region5
    $region4: #{tpu_custom_call.1} parent=1 // pred_region
      %s14 = ssub.s32 2048, 2048
      %15 = vsyncadd [#allocation3], %s14
      %s16 = sshll.u32 [#allocation2], 4
      %s17 = int_to_ptr.vmem [resolvable:$true] %s16
      %22 = dma.hbm_to_vmem [thread:$0]  %s0, 2048, %s17, [#allocation3], 256, 256, 16
    $region5: #{tpu_custom_call.1} parent=1 // pred_fallthru
      _
    // Predicated region
    $region6: #{tpu_custom_call.1} parent=1 // pred_check
      _
    $region7: #{tpu_custom_call.1} parent=1 // pred_check_branch
      %24 = sbr.rel (0) target = $region9
    $region8: #{tpu_custom_call.1} parent=1 // pred_region
      _
    $region9: #{tpu_custom_call.1} parent=1 // pred_fallthru
      _
    // Predicated region
    $region10: #{tpu_custom_call.1} parent=1 // pred_check
      _
    $region11: #{tpu_custom_call.1} parent=1 // pred_check_branch
      %26 = sbr.rel (0) target = $region13
    $region12: #{tpu_custom_call.1} parent=1 // pred_region
      _
    $region13: #{tpu_custom_call.1} parent=1 // pred_fallthru
      _
    // Predicated region
    $region14: #{tpu_custom_call.1} parent=1 // pred_check
      _
    $region15: #{tpu_custom_call.1} parent=1 // pred_check_branch
      %28 = sbr.rel (0) target = $region17
    $region16: #{tpu_custom_call.1} parent=1 // pred_region
      _
    $region17: #{tpu_custom_call.1} parent=1 // pred_fallthru
      _
    // Predicated region
    $region18: #{tpu_custom_call.1} parent=1 // pred_check
      _
    $region19: #{tpu_custom_call.1} parent=1 // pred_check_branch
      %30 = sbr.rel (0) target = $region21
    $region20: #{tpu_custom_call.1} parent=1 // pred_region
      %31 = dma.done [#allocation3], 2048
    $region21: #{tpu_custom_call.1} parent=1 // pred_fallthru
      _
    %v33 = vld [vmem:[%s2] sm:$0xff]
    %v34 = vld [vmem:[%s2 + $0x10] sm:$0xff]
    %v35 = vld [vmem:[%s2 + $0x20] sm:$0xff]
    %v36 = vld [vmem:[%s2 + $0x30] sm:$0xff]
    %v37 = vpack.c.bf16 %v34, %v33
    %v38 = vpack.c.bf16 %v36, %v35
    %v39 = vld [vmem:[%s2 + $0x8] sm:$0xff]
    %v40 = vld [vmem:[%s2 + $0x18] sm:$0xff]
    %v41 = vld [vmem:[%s2 + $0x28] sm:$0xff]
    %v42 = vld [vmem:[%s2 + $0x38] sm:$0xff]
    %v43 = vpack.c.bf16 %v40, %v39
    %v44 = vpack.c.bf16 %v42, %v41
    %v45 = vld [vmem:[%s3] sm:$0xff]
    %v46 = vld [vmem:[%s3 + $0x8] sm:$0xff]
    %v47 = vld [vmem:[%s3 + $0x10] sm:$0xff]
    %v48 = vld [vmem:[%s3 + $0x18] sm:$0xff]
    %v49 = vld [vmem:[%s3 + $0x20] sm:$0xff]
    %v50 = vld [vmem:[%s3 + $0x28] sm:$0xff]
    %v51 = vld [vmem:[%s3 + $0x30] sm:$0xff]
    %v52 = vld [vmem:[%s3 + $0x38] sm:$0xff]
    %v53 = vld [vmem:[#allocation2] sm:$0xff]
    %v54 = vld [vmem:[#allocation2 + $0x8] sm:$0xff]
    %v55 = vld [vmem:[#allocation2 + $0x10] sm:$0xff]
    %v56 = vld [vmem:[#allocation2 + $0x18] sm:$0xff]
    %v57 = vld [vmem:[#allocation2 + $0x20] sm:$0xff]
    %v58 = vld [vmem:[#allocation2 + $0x28] sm:$0xff]
    %v59 = vld [vmem:[#allocation2 + $0x30] sm:$0xff]
    %v60 = vld [vmem:[#allocation2 + $0x38] sm:$0xff]
    %v61 = vpack.c.bf16 %v55, %v53
    %v62 = vpack.c.bf16 %v56, %v54
    %v63 = vpack.c.bf16 %v59, %v57
    %v64 = vpack.c.bf16 %v60, %v58
    %v65 = vld [vmem:[%s1] sm:$0xff]
    %v66 = vpack.c.bf16 %v65, %v65
    %68 = vset.pattern.permute.xlu0 34
    %69 = vperm.xlu0 %68, %v39
    %v70 = vpop.permute.xlu0 %69
    %73 = vset.pattern.permute.xlu0 34
    %74 = vperm.xlu0 %73, %v40
    %v75 = vpop.permute.xlu0 %74
    %78 = vset.pattern.permute.xlu0 34
    %79 = vperm.xlu0 %78, %v41
    %v80 = vpop.permute.xlu0 %79
    %83 = vset.pattern.permute.xlu0 34
    %84 = vperm.xlu0 %83, %v42
    %v85 = vpop.permute.xlu0 %84
    %89 = vrot.lane.b32.xlu0 %v37, 64
    %v90 = vpop.permute.xlu0 %89
    %91 = vrot.lane.b32.xlu0 %v38, 64
    %v92 = vpop.permute.xlu0 %91
    %vm93 = vcmask 261120
    %v95 = vsel %vm93, %v90, 0
    %v98 = vsel %vm93, %v92, 0
    %100 = vmatprep.subr.bf16.mxu0 %v62
    %101 = vmatpush1.bf16.msra.mxu0 %v61
    %102 = vmatprep.subr.bf16.mxu0 %v64
    %103 = vmatpush1.bf16.msra.mxu0 %v63
    %104 = vmatprep.subr.bf16.mxu0 0
    %105 = vmatpush1.bf16.msra.mxu0 0
    %106 = vmatprep.subr.bf16.mxu0 0
    %107 = vmatpush1.bf16.msra.mxu0 0
    %108 = vmatprep.subr.bf16.mxu0 0
    %109 = vmatpush1.bf16.msra.mxu0 0
    %110 = vmatprep.subr.bf16.mxu0 0
    %111 = vmatpush1.bf16.msra.mxu0 0
    %112 = vmatprep.subr.bf16.mxu0 0
    %113 = vmatpush1.bf16.msra.mxu0 0
    %114 = vmatprep.subr.bf16.mxu0 0
    %115 = vmatpush1.bf16.msra.mxu0 0
    %116 = vmatprep.subr.bf16.mxu0 0
    %117 = vmatpush1.bf16.msra.mxu0 0
    %118 = vmatprep.subr.bf16.mxu0 0
    %119 = vmatpush1.bf16.msra.mxu0 0
    %120 = vmatprep.subr.bf16.mxu0 0
    %121 = vmatpush1.bf16.msra.mxu0 0
    %122 = vmatprep.subr.bf16.mxu0 0
    %123 = vmatpush1.bf16.msra.mxu0 0
    %124 = vmatprep.subr.bf16.mxu0 0
    %125 = vmatpush1.bf16.msra.mxu0 0
    %126 = vmatprep.subr.bf16.mxu0 0
    %127 = vmatpush1.bf16.msra.mxu0 0
    %128 = vmatprep.subr.bf16.mxu0 0
    %129 = vmatpush1.bf16.msra.mxu0 0
    %130 = vmatprep.subr.bf16.mxu0 0
    %131 = vmatpush1.bf16.msra.mxu0 0
    %132 = vmatprep.mubr.bf16.mxu0 0
    %133 = vmatmul.mubr.bf16.gmra.mrb[0].mxu0 %v95
    %v134 = vpop.f32.mrb[0].mxu0
    %v135 = vadd.f32 %v70, %v134
    %v136 = vpop.f32.mrb[0].mxu0
    %v137 = vadd.f32 %v70, %v136
    %v138 = vpop.f32.mrb[0].mxu0
    %v139 = vadd.f32 %v75, %v138
    %v140 = vpop.f32.mrb[0].mxu0
    %v141 = vadd.f32 %v75, %v140
    %142 = vmatprep.mubr.bf16.mxu0 0
    %143 = vmatmul.mubr.bf16.gmra.mrb[0].mxu0 %v98
    %v144 = vpop.f32.mrb[0].mxu0
    %v145 = vadd.f32 %v80, %v144
    %v146 = vpop.f32.mrb[0].mxu0
    %v147 = vadd.f32 %v80, %v146
    %v148 = vpop.f32.mrb[0].mxu0
    %v149 = vadd.f32 %v85, %v148
    %v150 = vpop.f32.mrb[0].mxu0
    %v151 = vadd.f32 %v85, %v150
    %152 = vdwg.mxu0
    %vm153 = vcmask 138240
    %v155 = vsel %vm153, %v66, 0
    %v158 = vsel %vm153, %v43, 0
    %v161 = vsel %vm153, %v44, 0
    %163 = vmatprep.subr.bf16.mxu0 0
    %164 = vmatpush1.bf16.xpose.msra.mxu0 %v158
    %165 = vmatprep.subr.bf16.mxu0 0
    %166 = vmatpush1.bf16.xpose.msra.mxu0 %v161
    %167 = vmatprep.subr.bf16.mxu0 0
    %168 = vmatpush1.bf16.xpose.msra.mxu0 0
    %169 = vmatprep.subr.bf16.mxu0 0
    %170 = vmatpush1.bf16.xpose.msra.mxu0 0
    %171 = vmatprep.subr.bf16.mxu0 0
    %172 = vmatpush1.bf16.xpose.msra.mxu0 0
    %173 = vmatprep.subr.bf16.mxu0 0
    %174 = vmatpush1.bf16.xpose.msra.mxu0 0
    %175 = vmatprep.subr.bf16.mxu0 0
    %176 = vmatpush1.bf16.xpose.msra.mxu0 0
    %177 = vmatprep.subr.bf16.mxu0 0
    %178 = vmatpush1.bf16.xpose.msra.mxu0 0
    %179 = vmatprep.subr.bf16.mxu0 0
    %180 = vmatpush1.bf16.xpose.msra.mxu0 0
    %181 = vmatprep.subr.bf16.mxu0 0
    %182 = vmatpush1.bf16.xpose.msra.mxu0 0
    %183 = vmatprep.subr.bf16.mxu0 0
    %184 = vmatpush1.bf16.xpose.msra.mxu0 0
    %185 = vmatprep.subr.bf16.mxu0 0
    %186 = vmatpush1.bf16.xpose.msra.mxu0 0
    %187 = vmatprep.subr.bf16.mxu0 0
    %188 = vmatpush1.bf16.xpose.msra.mxu0 0
    %189 = vmatprep.subr.bf16.mxu0 0
    %190 = vmatpush1.bf16.xpose.msra.mxu0 0
    %191 = vmatprep.subr.bf16.mxu0 0
    %192 = vmatpush1.bf16.xpose.msra.mxu0 0
    %193 = vmatprep.subr.bf16.mxu0 0
    %194 = vmatpush1.bf16.xpose.msra.mxu0 0
    %195 = vmatprep.mubr.bf16.mxu0 0
    %196 = vmatmul.mubr.bf16.gmra.mrb[0].mxu0 %v155
    %v197 = vpop.f32.mrb[0].mxu0
    %v198 = vadd.f32 0.0, %v197
    %v199 = vpop.f32.mrb[0].mxu0
    %v200 = vpop.f32.mrb[0].mxu0
    %v201 = vpop.f32.mrb[0].mxu0
    %202 = vdwg.mxu0
    %205 = vrot.lane.b32.xlu0 %v43, 111
    %v206 = vpop.permute.xlu0 %205
    %207 = vrot.lane.b32.xlu0 %v44, 111
    %v208 = vpop.permute.xlu0 %207
    %v210 = vsel %vm153, %v206, 0
    %v213 = vsel %vm153, %v208, 0
    %215 = vmatprep.subr.bf16.mxu0 0
    %216 = vmatpush1.bf16.xpose.msra.mxu0 %v155
    %217 = vmatprep.subr.bf16.mxu0 0
    %218 = vmatpush1.bf16.xpose.msra.mxu0 0
    %219 = vmatprep.subr.bf16.mxu0 0
    %220 = vmatpush1.bf16.xpose.msra.mxu0 0
    %221 = vmatprep.subr.bf16.mxu0 0
    %222 = vmatpush1.bf16.xpose.msra.mxu0 0
    %223 = vmatprep.subr.bf16.mxu0 0
    %224 = vmatpush1.bf16.xpose.msra.mxu0 0
    %225 = vmatprep.subr.bf16.mxu0 0
    %226 = vmatpush1.bf16.xpose.msra.mxu0 0
    %227 = vmatprep.subr.bf16.mxu0 0
    %228 = vmatpush1.bf16.xpose.msra.mxu0 0
    %229 = vmatprep.subr.bf16.mxu0 0
    %230 = vmatpush1.bf16.xpose.msra.mxu0 0
    %231 = vmatprep.subr.bf16.mxu0 0
    %232 = vmatpush1.bf16.xpose.msra.mxu0 0
    %233 = vmatprep.subr.bf16.mxu0 0
    %234 = vmatpush1.bf16.xpose.msra.mxu0 0
    %235 = vmatprep.subr.bf16.mxu0 0
    %236 = vmatpush1.bf16.xpose.msra.mxu0 0
    %237 = vmatprep.subr.bf16.mxu0 0
    %238 = vmatpush1.bf16.xpose.msra.mxu0 0
    %239 = vmatprep.subr.bf16.mxu0 0
    %240 = vmatpush1.bf16.xpose.msra.mxu0 0
    %241 = vmatprep.subr.bf16.mxu0 0
    %242 = vmatpush1.bf16.xpose.msra.mxu0 0
    %243 = vmatprep.subr.bf16.mxu0 0
    %244 = vmatpush1.bf16.xpose.msra.mxu0 0
    %245 = vmatprep.subr.bf16.mxu0 0
    %246 = vmatpush1.bf16.xpose.msra.mxu0 0
    %247 = vmatprep.mubr.bf16.mxu0 0
    %248 = vmatmul.mubr.bf16.gmra.mrb[0].mxu0 %v210
    %v249 = vpop.f32.mrb[0].mxu0
    %v250 = vadd.f32 0.0, %v249
    %v251 = vpop.f32.mrb[0].mxu0
    %v252 = vpop.f32.mrb[0].mxu0
    %v253 = vadd.f32 0.0, %v252
    %v254 = vpop.f32.mrb[0].mxu0
    %255 = vmatprep.mubr.bf16.mxu0 0
    %256 = vmatmul.mubr.bf16.gmra.mrb[0].mxu0 %v213
    %v257 = vpop.f32.mrb[0].mxu0
    %v258 = vadd.f32 0.0, %v257
    %v259 = vpop.f32.mrb[0].mxu0
    %v260 = vpop.f32.mrb[0].mxu0
    %v261 = vadd.f32 0.0, %v260
    %v262 = vpop.f32.mrb[0].mxu0
    %263 = vdwg.mxu0
    %v264 = vmul.f32 %v198, %v45
    %v265 = vmul.f32 %v198, %v46
    %v266 = vmul.f32 %v198, %v47
    %v267 = vmul.f32 %v198, %v48
    %v268 = vmul.f32 %v198, %v49
    %v269 = vmul.f32 %v198, %v50
    %v270 = vmul.f32 %v198, %v51
    %v271 = vmul.f32 %v198, %v52
    %276 = vrot.lane.b32.xlu0 %v250, 8
    %v277 = vpop.permute.xlu0 %276
    %278 = vrot.lane.b32.xlu0 %v253, 8
    %v279 = vpop.permute.xlu0 %278
    %280 = vrot.lane.b32.xlu0 %v258, 8
    %v281 = vpop.permute.xlu0 %280
    %282 = vrot.lane.b32.xlu0 %v261, 8
    %v283 = vpop.permute.xlu0 %282
    %288 = vrot.lane.b32.xlu0 %v250, 16
    %v289 = vpop.permute.xlu0 %288
    %290 = vrot.lane.b32.xlu0 %v253, 16
    %v291 = vpop.permute.xlu0 %290
    %292 = vrot.lane.b32.xlu0 %v258, 16
    %v293 = vpop.permute.xlu0 %292
    %294 = vrot.lane.b32.xlu0 %v261, 16
    %v295 = vpop.permute.xlu0 %294
    %300 = vrot.lane.b32.xlu0 %v250, 24
    %v301 = vpop.permute.xlu0 %300
    %302 = vrot.lane.b32.xlu0 %v253, 24
    %v303 = vpop.permute.xlu0 %302
    %304 = vrot.lane.b32.xlu0 %v258, 24
    %v305 = vpop.permute.xlu0 %304
    %306 = vrot.lane.b32.xlu0 %v261, 24
    %v307 = vpop.permute.xlu0 %306
    %312 = vrot.lane.b32.xlu0 %v250, 32
    %v313 = vpop.permute.xlu0 %312
    %314 = vrot.lane.b32.xlu0 %v253, 32
    %v315 = vpop.permute.xlu0 %314
    %316 = vrot.lane.b32.xlu0 %v258, 32
    %v317 = vpop.permute.xlu0 %316
    %318 = vrot.lane.b32.xlu0 %v261, 32
    %v319 = vpop.permute.xlu0 %318
    %324 = vrot.lane.b32.xlu0 %v250, 40
    %v325 = vpop.permute.xlu0 %324
    %326 = vrot.lane.b32.xlu0 %v253, 40
    %v327 = vpop.permute.xlu0 %326
    %328 = vrot.lane.b32.xlu0 %v258, 40
    %v329 = vpop.permute.xlu0 %328
    %330 = vrot.lane.b32.xlu0 %v261, 40
    %v331 = vpop.permute.xlu0 %330
    %336 = vrot.lane.b32.xlu0 %v250, 48
    %v337 = vpop.permute.xlu0 %336
    %338 = vrot.lane.b32.xlu0 %v253, 48
    %v339 = vpop.permute.xlu0 %338
    %340 = vrot.lane.b32.xlu0 %v258, 48
    %v341 = vpop.permute.xlu0 %340
    %342 = vrot.lane.b32.xlu0 %v261, 48
    %v343 = vpop.permute.xlu0 %342
    %348 = vrot.lane.b32.xlu0 %v250, 56
    %v349 = vpop.permute.xlu0 %348
    %350 = vrot.lane.b32.xlu0 %v253, 56
    %v351 = vpop.permute.xlu0 %350
    %352 = vrot.lane.b32.xlu0 %v258, 56
    %v353 = vpop.permute.xlu0 %352
    %354 = vrot.lane.b32.xlu0 %v261, 56
    %v355 = vpop.permute.xlu0 %354
    %vm360 = vcmask 64512
    %v361 = vsel %vm360, %v250, %v277
    %v362 = vsel %vm360, %v253, %v279
    %v363 = vsel %vm360, %v258, %v281
    %v364 = vsel %vm360, %v261, %v283
    %vm365 = vcmask 130048
    %v366 = vsel %vm365, %v361, %v289
    %v367 = vsel %vm365, %v362, %v291
    %v368 = vsel %vm365, %v363, %v293
    %v369 = vsel %vm365, %v364, %v295
    %vm370 = vcmask 195584
    %v371 = vsel %vm370, %v366, %v301
    %v372 = vsel %vm370, %v367, %v303
    %v373 = vsel %vm370, %v368, %v305
    %v374 = vsel %vm370, %v369, %v307
    %v375 = vsel %vm93, %v371, %v313
    %v376 = vsel %vm93, %v372, %v315
    %v377 = vsel %vm93, %v373, %v317
    %v378 = vsel %vm93, %v374, %v319
    %vm379 = vcmask 326656
    %v380 = vsel %vm379, %v375, %v325
    %v381 = vsel %vm379, %v376, %v327
    %v382 = vsel %vm379, %v377, %v329
    %v383 = vsel %vm379, %v378, %v331
    %vm384 = vcmask 392192
    %v385 = vsel %vm384, %v380, %v337
    %v386 = vsel %vm384, %v381, %v339
    %v387 = vsel %vm384, %v382, %v341
    %v388 = vsel %vm384, %v383, %v343
    %vm389 = vcmask 457728
    %v390 = vsel %vm389, %v385, %v349
    %v391 = vsel %vm389, %v386, %v351
    %v392 = vsel %vm389, %v387, %v353
    %v393 = vsel %vm389, %v388, %v355
    %v394 = vmul.f32 %v390, %v33
    %v395 = vmul.f32 %v391, %v34
    %v396 = vmul.f32 %v392, %v35
    %v397 = vmul.f32 %v393, %v36
    %v398 = vpack.c.bf16 %v265, %v264
    %v399 = vpack.c.bf16 %v267, %v266
    %v400 = vpack.c.bf16 %v269, %v268
    %v401 = vpack.c.bf16 %v271, %v270
    %v402 = vpack.c.bf16 %v139, %v135
    %v403 = vpack.c.bf16 %v141, %v137
    %v404 = vpack.c.bf16 %v149, %v145
    %v405 = vpack.c.bf16 %v151, %v147
    %v407 = vsel %vm93, %v398, 0
    %v410 = vsel %vm93, %v399, 0
    %v413 = vsel %vm93, %v400, 0
    %v416 = vsel %vm93, %v401, 0
    %418 = vmatprep.subr.bf16.mxu0 %v403
    %419 = vmatpush1.bf16.msra.mxu0 %v402
    %420 = vmatprep.subr.bf16.mxu0 %v405
    %421 = vmatpush1.bf16.msra.mxu0 %v404
    %422 = vmatprep.subr.bf16.mxu0 0
    %423 = vmatpush1.bf16.msra.mxu0 0
    %424 = vmatprep.subr.bf16.mxu0 0
    %425 = vmatpush1.bf16.msra.mxu0 0
    %426 = vmatprep.subr.bf16.mxu0 0
    %427 = vmatpush1.bf16.msra.mxu0 0
    %428 = vmatprep.subr.bf16.mxu0 0
    %429 = vmatpush1.bf16.msra.mxu0 0
    %430 = vmatprep.subr.bf16.mxu0 0
    %431 = vmatpush1.bf16.msra.mxu0 0
    %432 = vmatprep.subr.bf16.mxu0 0
    %433 = vmatpush1.bf16.msra.mxu0 0
    %434 = vmatprep.subr.bf16.mxu0 0
    %435 = vmatpush1.bf16.msra.mxu0 0
    %436 = vmatprep.subr.bf16.mxu0 0
    %437 = vmatpush1.bf16.msra.mxu0 0
    %438 = vmatprep.subr.bf16.mxu0 0
    %439 = vmatpush1.bf16.msra.mxu0 0
    %440 = vmatprep.subr.bf16.mxu0 0
    %441 = vmatpush1.bf16.msra.mxu0 0
    %442 = vmatprep.subr.bf16.mxu0 0
    %443 = vmatpush1.bf16.msra.mxu0 0
    %444 = vmatprep.subr.bf16.mxu0 0
    %445 = vmatpush1.bf16.msra.mxu0 0
    %446 = vmatprep.subr.bf16.mxu0 0
    %447 = vmatpush1.bf16.msra.mxu0 0
    %448 = vmatprep.subr.bf16.mxu0 0
    %449 = vmatpush1.bf16.msra.mxu0 0
    %450 = vmatprep.mubr.bf16.mxu0 0
    %451 = vmatmul.mubr.bf16.gmra.mrb[0].mxu0 %v407
    %v452 = vpop.f32.mrb[0].mxu0
    %v453 = vadd.f32 0.0, %v452
    %v454 = vpop.f32.mrb[0].mxu0
    %v455 = vadd.f32 0.0, %v454
    %v456 = vpop.f32.mrb[0].mxu0
    %v457 = vadd.f32 0.0, %v456
    %v458 = vpop.f32.mrb[0].mxu0
    %v459 = vadd.f32 0.0, %v458
    %460 = vmatprep.mubr.bf16.mxu0 0
    %461 = vmatmul.mubr.bf16.gmra.mrb[0].mxu0 %v410
    %v462 = vpop.f32.mrb[0].mxu0
    %v463 = vadd.f32 0.0, %v462
    %v464 = vpop.f32.mrb[0].mxu0
    %v465 = vadd.f32 0.0, %v464
    %v466 = vpop.f32.mrb[0].mxu0
    %v467 = vadd.f32 0.0, %v466
    %v468 = vpop.f32.mrb[0].mxu0
    %v469 = vadd.f32 0.0, %v468
    %470 = vmatprep.mubr.bf16.mxu0 0
    %471 = vmatmul.mubr.bf16.gmra.mrb[0].mxu0 %v413
    %v472 = vpop.f32.mrb[0].mxu0
    %v473 = vadd.f32 0.0, %v472
    %v474 = vpop.f32.mrb[0].mxu0
    %v475 = vadd.f32 0.0, %v474
    %v476 = vpop.f32.mrb[0].mxu0
    %v477 = vadd.f32 0.0, %v476
    %v478 = vpop.f32.mrb[0].mxu0
    %v479 = vadd.f32 0.0, %v478
    %480 = vmatprep.mubr.bf16.mxu0 0
    %481 = vmatmul.mubr.bf16.gmra.mrb[0].mxu0 %v416
    %v482 = vpop.f32.mrb[0].mxu0
    %v483 = vadd.f32 0.0, %v482
    %v484 = vpop.f32.mrb[0].mxu0
    %v485 = vadd.f32 0.0, %v484
    %v486 = vpop.f32.mrb[0].mxu0
    %v487 = vadd.f32 0.0, %v486
    %v488 = vpop.f32.mrb[0].mxu0
    %v489 = vadd.f32 0.0, %v488
    %490 = vdwg.mxu0
    %v491 = vrot.slane %v453, 4
    %v492 = vmax.f32 %v453, %v491
    %v493 = vrot.slane %v492, 2
    %v494 = vmax.f32 %v492, %v493
    %v495 = vrot.slane %v494, 1
    %v496 = vmax.f32 %v494, %v495
    %v497 = vrot.slane %v455, 4
    %v498 = vmax.f32 %v455, %v497
    %v499 = vrot.slane %v498, 2
    %v500 = vmax.f32 %v498, %v499
    %v501 = vrot.slane %v500, 1
    %v502 = vmax.f32 %v500, %v501
    %v503 = vsub.f32 %v453, %v496
    %v504 = vsub.f32 %v455, %v502
    %v505 = vmul.f32 %v503, 1.442695
    %v506 = vpow.pop %v505
    %v507 = vmul.f32 %v504, 1.442695
    %v508 = vpow.pop %v507
    %v509 = vrot.slane %v506, 4
    %v510 = vadd.f32 %v506, %v509
    %v511 = vrot.slane %v510, 2
    %v512 = vadd.f32 %v510, %v511
    %v513 = vrot.slane %v512, 1
    %v514 = vadd.f32 %v512, %v513
    %v515 = vrot.slane %v508, 4
    %v516 = vadd.f32 %v508, %v515
    %v517 = vrot.slane %v516, 2
    %v518 = vadd.f32 %v516, %v517
    %v519 = vrot.slane %v518, 1
    %v520 = vadd.f32 %v518, %v519
    %v521 = vrcp.pop %v514
    %v522 = vrcp.pop %v520
    %v523 = vmul.f32 %v506, %v521
    %v524 = vmul.f32 %v508, %v522
    %v525 = vrot.slane %v457, 4
    %v526 = vmax.f32 %v457, %v525
    %v527 = vrot.slane %v526, 2
    %v528 = vmax.f32 %v526, %v527
    %v529 = vrot.slane %v528, 1
    %v530 = vmax.f32 %v528, %v529
    %v531 = vrot.slane %v459, 4
    %v532 = vmax.f32 %v459, %v531
    %v533 = vrot.slane %v532, 2
    %v534 = vmax.f32 %v532, %v533
    %v535 = vrot.slane %v534, 1
    %v536 = vmax.f32 %v534, %v535
    %v537 = vsub.f32 %v457, %v530
    %v538 = vsub.f32 %v459, %v536
    %v539 = vmul.f32 %v537, 1.442695
    %v540 = vpow.pop %v539
    %v541 = vmul.f32 %v538, 1.442695
    %v542 = vpow.pop %v541
    %v543 = vrot.slane %v540, 4
    %v544 = vadd.f32 %v540, %v543
    %v545 = vrot.slane %v544, 2
    %v546 = vadd.f32 %v544, %v545
    %v547 = vrot.slane %v546, 1
    %v548 = vadd.f32 %v546, %v547
    %v549 = vrot.slane %v542, 4
    %v550 = vadd.f32 %v542, %v549
    %v551 = vrot.slane %v550, 2
    %v552 = vadd.f32 %v550, %v551
    %v553 = vrot.slane %v552, 1
    %v554 = vadd.f32 %v552, %v553
    %v555 = vrcp.pop %v548
    %v556 = vrcp.pop %v554
    %v557 = vmul.f32 %v540, %v555
    %v558 = vmul.f32 %v542, %v556
    %v559 = vrot.slane %v463, 4
    %v560 = vmax.f32 %v463, %v559
    %v561 = vrot.slane %v560, 2
    %v562 = vmax.f32 %v560, %v561
    %v563 = vrot.slane %v562, 1
    %v564 = vmax.f32 %v562, %v563
    %v565 = vrot.slane %v465, 4
    %v566 = vmax.f32 %v465, %v565
    %v567 = vrot.slane %v566, 2
    %v568 = vmax.f32 %v566, %v567
    %v569 = vrot.slane %v568, 1
    %v570 = vmax.f32 %v568, %v569
    %v571 = vsub.f32 %v463, %v564
    %v572 = vsub.f32 %v465, %v570
    %v573 = vmul.f32 %v571, 1.442695
    %v574 = vpow.pop %v573
    %v575 = vmul.f32 %v572, 1.442695
    %v576 = vpow.pop %v575
    %v577 = vrot.slane %v574, 4
    %v578 = vadd.f32 %v574, %v577
    %v579 = vrot.slane %v578, 2
    %v580 = vadd.f32 %v578, %v579
    %v581 = vrot.slane %v580, 1
    %v582 = vadd.f32 %v580, %v581
    %v583 = vrot.slane %v576, 4
    %v584 = vadd.f32 %v576, %v583
    %v585 = vrot.slane %v584, 2
    %v586 = vadd.f32 %v584, %v585
    %v587 = vrot.slane %v586, 1
    %v588 = vadd.f32 %v586, %v587
    %v589 = vrcp.pop %v582
    %v590 = vrcp.pop %v588
    %v591 = vmul.f32 %v574, %v589
    %v592 = vmul.f32 %v576, %v590
    %v593 = vrot.slane %v467, 4
    %v594 = vmax.f32 %v467, %v593
    %v595 = vrot.slane %v594, 2
    %v596 = vmax.f32 %v594, %v595
    %v597 = vrot.slane %v596, 1
    %v598 = vmax.f32 %v596, %v597
    %v599 = vrot.slane %v469, 4
    %v600 = vmax.f32 %v469, %v599
    %v601 = vrot.slane %v600, 2
    %v602 = vmax.f32 %v600, %v601
    %v603 = vrot.slane %v602, 1
    %v604 = vmax.f32 %v602, %v603
    %v605 = vsub.f32 %v467, %v598
    %v606 = vsub.f32 %v469, %v604
    %v607 = vmul.f32 %v605, 1.442695
    %v608 = vpow.pop %v607
    %v609 = vmul.f32 %v606, 1.442695
    %v610 = vpow.pop %v609
    %v611 = vrot.slane %v608, 4
    %v612 = vadd.f32 %v608, %v611
    %v613 = vrot.slane %v612, 2
    %v614 = vadd.f32 %v612, %v613
    %v615 = vrot.slane %v614, 1
    %v616 = vadd.f32 %v614, %v615
    %v617 = vrot.slane %v610, 4
    %v618 = vadd.f32 %v610, %v617
    %v619 = vrot.slane %v618, 2
    %v620 = vadd.f32 %v618, %v619
    %v621 = vrot.slane %v620, 1
    %v622 = vadd.f32 %v620, %v621
    %v623 = vrcp.pop %v616
    %v624 = vrcp.pop %v622
    %v625 = vmul.f32 %v608, %v623
    %v626 = vmul.f32 %v610, %v624
    %v627 = vrot.slane %v473, 4
    %v628 = vmax.f32 %v473, %v627
    %v629 = vrot.slane %v628, 2
    %v630 = vmax.f32 %v628, %v629
    %v631 = vrot.slane %v630, 1
    %v632 = vmax.f32 %v630, %v631
    %v633 = vrot.slane %v475, 4
    %v634 = vmax.f32 %v475, %v633
    %v635 = vrot.slane %v634, 2
    %v636 = vmax.f32 %v634, %v635
    %v637 = vrot.slane %v636, 1
    %v638 = vmax.f32 %v636, %v637
    %v639 = vsub.f32 %v473, %v632
    %v640 = vsub.f32 %v475, %v638
    %v641 = vmul.f32 %v639, 1.442695
    %v642 = vpow.pop %v641
    %v643 = vmul.f32 %v640, 1.442695
    %v644 = vpow.pop %v643
    %v645 = vrot.slane %v642, 4
    %v646 = vadd.f32 %v642, %v645
    %v647 = vrot.slane %v646, 2
    %v648 = vadd.f32 %v646, %v647
    %v649 = vrot.slane %v648, 1
    %v650 = vadd.f32 %v648, %v649
    %v651 = vrot.slane %v644, 4
    %v652 = vadd.f32 %v644, %v651
    %v653 = vrot.slane %v652, 2
    %v654 = vadd.f32 %v652, %v653
    %v655 = vrot.slane %v654, 1
    %v656 = vadd.f32 %v654, %v655
    %v657 = vrcp.pop %v650
    %v658 = vrcp.pop %v656
    %v659 = vmul.f32 %v642, %v657
    %v660 = vmul.f32 %v644, %v658
    %v661 = vrot.slane %v477, 4
    %v662 = vmax.f32 %v477, %v661
    %v663 = vrot.slane %v662, 2
    %v664 = vmax.f32 %v662, %v663
    %v665 = vrot.slane %v664, 1
    %v666 = vmax.f32 %v664, %v665
    %v667 = vrot.slane %v479, 4
    %v668 = vmax.f32 %v479, %v667
    %v669 = vrot.slane %v668, 2
    %v670 = vmax.f32 %v668, %v669
    %v671 = vrot.slane %v670, 1
    %v672 = vmax.f32 %v670, %v671
    %v673 = vsub.f32 %v477, %v666
    %v674 = vsub.f32 %v479, %v672
    %v675 = vmul.f32 %v673, 1.442695
    %v676 = vpow.pop %v675
    %v677 = vmul.f32 %v674, 1.442695
    %v678 = vpow.pop %v677
    %v679 = vrot.slane %v676, 4
    %v680 = vadd.f32 %v676, %v679
    %v681 = vrot.slane %v680, 2
    %v682 = vadd.f32 %v680, %v681
    %v683 = vrot.slane %v682, 1
    %v684 = vadd.f32 %v682, %v683
    %v685 = vrot.slane %v678, 4
    %v686 = vadd.f32 %v678, %v685
    %v687 = vrot.slane %v686, 2
    %v688 = vadd.f32 %v686, %v687
    %v689 = vrot.slane %v688, 1
    %v690 = vadd.f32 %v688, %v689
    %v691 = vrcp.pop %v684
    %v692 = vrcp.pop %v690
    %v693 = vmul.f32 %v676, %v691
    %v694 = vmul.f32 %v678, %v692
    %v695 = vrot.slane %v483, 4
    %v696 = vmax.f32 %v483, %v695
    %v697 = vrot.slane %v696, 2
    %v698 = vmax.f32 %v696, %v697
    %v699 = vrot.slane %v698, 1
    %v700 = vmax.f32 %v698, %v699
    %v701 = vrot.slane %v485, 4
    %v702 = vmax.f32 %v485, %v701
    %v703 = vrot.slane %v702, 2
    %v704 = vmax.f32 %v702, %v703
    %v705 = vrot.slane %v704, 1
    %v706 = vmax.f32 %v704, %v705
    %v707 = vsub.f32 %v483, %v700
    %v708 = vsub.f32 %v485, %v706
    %v709 = vmul.f32 %v707, 1.442695
    %v710 = vpow.pop %v709
    %v711 = vmul.f32 %v708, 1.442695
    %v712 = vpow.pop %v711
    %v713 = vrot.slane %v710, 4
    %v714 = vadd.f32 %v710, %v713
    %v715 = vrot.slane %v714, 2
    %v716 = vadd.f32 %v714, %v715
    %v717 = vrot.slane %v716, 1
    %v718 = vadd.f32 %v716, %v717
    %v719 = vrot.slane %v712, 4
    %v720 = vadd.f32 %v712, %v719
    %v721 = vrot.slane %v720, 2
    %v722 = vadd.f32 %v720, %v721
    %v723 = vrot.slane %v722, 1
    %v724 = vadd.f32 %v722, %v723
    %v725 = vrcp.pop %v718
    %v726 = vrcp.pop %v724
    %v727 = vmul.f32 %v710, %v725
    %v728 = vmul.f32 %v712, %v726
    %v729 = vrot.slane %v487, 4
    %v730 = vmax.f32 %v487, %v729
    %v731 = vrot.slane %v730, 2
    %v732 = vmax.f32 %v730, %v731
    %v733 = vrot.slane %v732, 1
    %v734 = vmax.f32 %v732, %v733
    %v735 = vrot.slane %v489, 4
    %v736 = vmax.f32 %v489, %v735
    %v737 = vrot.slane %v736, 2
    %v738 = vmax.f32 %v736, %v737
    %v739 = vrot.slane %v738, 1
    %v740 = vmax.f32 %v738, %v739
    %v741 = vsub.f32 %v487, %v734
    %v742 = vsub.f32 %v489, %v740
    %v743 = vmul.f32 %v741, 1.442695
    %v744 = vpow.pop %v743
    %v745 = vmul.f32 %v742, 1.442695
    %v746 = vpow.pop %v745
    %v747 = vrot.slane %v744, 4
    %v748 = vadd.f32 %v744, %v747
    %v749 = vrot.slane %v748, 2
    %v750 = vadd.f32 %v748, %v749
    %v751 = vrot.slane %v750, 1
    %v752 = vadd.f32 %v750, %v751
    %v753 = vrot.slane %v746, 4
    %v754 = vadd.f32 %v746, %v753
    %v755 = vrot.slane %v754, 2
    %v756 = vadd.f32 %v754, %v755
    %v757 = vrot.slane %v756, 1
    %v758 = vadd.f32 %v756, %v757
    %v759 = vrcp.pop %v752
    %v760 = vrcp.pop %v758
    %v761 = vmul.f32 %v744, %v759
    %v762 = vmul.f32 %v746, %v760
    %v763 = vpack.c.bf16 %v557, %v523
    %v764 = vpack.c.bf16 %v558, %v524
    %v765 = vpack.c.bf16 %v625, %v591
    %v766 = vpack.c.bf16 %v626, %v592
    %v767 = vpack.c.bf16 %v693, %v659
    %v768 = vpack.c.bf16 %v694, %v660
    %v769 = vpack.c.bf16 %v761, %v727
    %v770 = vpack.c.bf16 %v762, %v728
    %v771 = vpack.c.bf16 %v395, %v394
    %v772 = vpack.c.bf16 %v397, %v396
    %vm773 = vcmask 523264
    %v775 = vsel %vm773, %v771, 0
    %v778 = vsel %vm773, %v772, 0
    %780 = vmatprep.subr.bf16.mxu0 %v764
    %781 = vmatpush1.bf16.msra.mxu0 %v763
    %782 = vmatprep.subr.bf16.mxu0 %v766
    %783 = vmatpush1.bf16.msra.mxu0 %v765
    %784 = vmatprep.subr.bf16.mxu0 %v768
    %785 = vmatpush1.bf16.msra.mxu0 %v767
    %786 = vmatprep.subr.bf16.mxu0 %v770
    %787 = vmatpush1.bf16.msra.mxu0 %v769
    %788 = vmatprep.subr.bf16.mxu0 0
    %789 = vmatpush1.bf16.msra.mxu0 0
    %790 = vmatprep.subr.bf16.mxu0 0
    %791 = vmatpush1.bf16.msra.mxu0 0
    %792 = vmatprep.subr.bf16.mxu0 0
    %793 = vmatpush1.bf16.msra.mxu0 0
    %794 = vmatprep.subr.bf16.mxu0 0
    %795 = vmatpush1.bf16.msra.mxu0 0
    %796 = vmatprep.subr.bf16.mxu0 0
    %797 = vmatpush1.bf16.msra.mxu0 0
    %798 = vmatprep.subr.bf16.mxu0 0
    %799 = vmatpush1.bf16.msra.mxu0 0
    %800 = vmatprep.subr.bf16.mxu0 0
    %801 = vmatpush1.bf16.msra.mxu0 0
    %802 = vmatprep.subr.bf16.mxu0 0
    %803 = vmatpush1.bf16.msra.mxu0 0
    %804 = vmatprep.subr.bf16.mxu0 0
    %805 = vmatpush1.bf16.msra.mxu0 0
    %806 = vmatprep.subr.bf16.mxu0 0
    %807 = vmatpush1.bf16.msra.mxu0 0
    %808 = vmatprep.subr.bf16.mxu0 0
    %809 = vmatpush1.bf16.msra.mxu0 0
    %810 = vmatprep.subr.bf16.mxu0 0
    %811 = vmatpush1.bf16.msra.mxu0 0
    %812 = vmatprep.mubr.bf16.mxu0 0
    %813 = vmatmul.mubr.bf16.gmra.mrb[0].mxu0 %v775
    %v814 = vpop.f32.mrb[0].mxu0
    %v815 = vadd.f32 0.0, %v814
    %v816 = vpop.f32.mrb[0].mxu0
    %v817 = vadd.f32 0.0, %v816
    %v818 = vpop.f32.mrb[0].mxu0
    %v819 = vadd.f32 0.0, %v818
    %v820 = vpop.f32.mrb[0].mxu0
    %v821 = vadd.f32 0.0, %v820
    %822 = vmatprep.mubr.bf16.mxu0 0
    %823 = vmatmul.mubr.bf16.gmra.mrb[0].mxu0 %v778
    %v824 = vpop.f32.mrb[0].mxu0
    %v825 = vadd.f32 0.0, %v824
    %v826 = vpop.f32.mrb[0].mxu0
    %v827 = vadd.f32 0.0, %v826
    %v828 = vpop.f32.mrb[0].mxu0
    %v829 = vadd.f32 0.0, %v828
    %v830 = vpop.f32.mrb[0].mxu0
    %v831 = vadd.f32 0.0, %v830
    %832 = vdwg.mxu0
    %v833 = vpack.c.bf16 %v819, %v815
    %v834 = vpack.c.bf16 %v821, %v817
    %v835 = vpack.c.bf16 %v829, %v825
    %v836 = vpack.c.bf16 %v831, %v827
    %837 = vset.pattern.permute.xlu0 35
    %838 = vperm.xlu0 %837, %v39
    %v839 = vpop.permute.xlu0 %838
    %841 = vset.pattern.permute.xlu0 35
    %842 = vperm.xlu0 %841, %v40
    %v843 = vpop.permute.xlu0 %842
    %845 = vset.pattern.permute.xlu0 35
    %846 = vperm.xlu0 %845, %v41
    %v847 = vpop.permute.xlu0 %846
    %849 = vset.pattern.permute.xlu0 35
    %850 = vperm.xlu0 %849, %v42
    %v851 = vpop.permute.xlu0 %850
    %853 = vrot.lane.b32.xlu0 %v37, 32
    %v854 = vpop.permute.xlu0 %853
    %855 = vrot.lane.b32.xlu0 %v38, 32
    %v856 = vpop.permute.xlu0 %855
    %v858 = vsel %vm93, %v854, 0
    %v861 = vsel %vm93, %v856, 0
    %863 = vmatprep.subr.bf16.mxu0 %v834
    %864 = vmatpush1.bf16.msra.mxu0 %v833
    %865 = vmatprep.subr.bf16.mxu0 %v836
    %866 = vmatpush1.bf16.msra.mxu0 %v835
    %867 = vmatprep.subr.bf16.mxu0 0
    %868 = vmatpush1.bf16.msra.mxu0 0
    %869 = vmatprep.subr.bf16.mxu0 0
    %870 = vmatpush1.bf16.msra.mxu0 0
    %871 = vmatprep.subr.bf16.mxu0 0
    %872 = vmatpush1.bf16.msra.mxu0 0
    %873 = vmatprep.subr.bf16.mxu0 0
    %874 = vmatpush1.bf16.msra.mxu0 0
    %875 = vmatprep.subr.bf16.mxu0 0
    %876 = vmatpush1.bf16.msra.mxu0 0
    %877 = vmatprep.subr.bf16.mxu0 0
    %878 = vmatpush1.bf16.msra.mxu0 0
    %879 = vmatprep.subr.bf16.mxu0 0
    %880 = vmatpush1.bf16.msra.mxu0 0
    %881 = vmatprep.subr.bf16.mxu0 0
    %882 = vmatpush1.bf16.msra.mxu0 0
    %883 = vmatprep.subr.bf16.mxu0 0
    %884 = vmatpush1.bf16.msra.mxu0 0
    %885 = vmatprep.subr.bf16.mxu0 0
    %886 = vmatpush1.bf16.msra.mxu0 0
    %887 = vmatprep.subr.bf16.mxu0 0
    %888 = vmatpush1.bf16.msra.mxu0 0
    %889 = vmatprep.subr.bf16.mxu0 0
    %890 = vmatpush1.bf16.msra.mxu0 0
    %891 = vmatprep.subr.bf16.mxu0 0
    %892 = vmatpush1.bf16.msra.mxu0 0
    %893 = vmatprep.subr.bf16.mxu0 0
    %894 = vmatpush1.bf16.msra.mxu0 0
    %895 = vmatprep.mubr.bf16.mxu0 0
    %896 = vmatmul.mubr.bf16.gmra.mrb[0].mxu0 %v858
    %v897 = vpop.f32.mrb[0].mxu0
    %v898 = vadd.f32 %v839, %v897
    %v899 = vpop.f32.mrb[0].mxu0
    %v900 = vadd.f32 %v839, %v899
    %v901 = vpop.f32.mrb[0].mxu0
    %v902 = vadd.f32 %v843, %v901
    %v903 = vpop.f32.mrb[0].mxu0
    %v904 = vadd.f32 %v843, %v903
    %905 = vmatprep.mubr.bf16.mxu0 0
    %906 = vmatmul.mubr.bf16.gmra.mrb[0].mxu0 %v861
    %v907 = vpop.f32.mrb[0].mxu0
    %v908 = vadd.f32 %v847, %v907
    %v909 = vpop.f32.mrb[0].mxu0
    %v910 = vadd.f32 %v847, %v909
    %v911 = vpop.f32.mrb[0].mxu0
    %v912 = vadd.f32 %v851, %v911
    %v913 = vpop.f32.mrb[0].mxu0
    %v914 = vadd.f32 %v851, %v913
    %915 = vdwg.mxu0
    %916 = vst [vmem:[#allocation5] sm:$0xff] %v898
    %917 = vst [vmem:[#allocation5 + $0x8] sm:$0xff] %v900
    %918 = vst [vmem:[#allocation5 + $0x10] sm:$0xff] %v902
    %919 = vst [vmem:[#allocation5 + $0x18] sm:$0xff] %v904
    %920 = vst [vmem:[#allocation5 + $0x20] sm:$0xff] %v908
    %921 = vst [vmem:[#allocation5 + $0x28] sm:$0xff] %v910
    %922 = vst [vmem:[#allocation5 + $0x30] sm:$0xff] %v912
    %923 = vst [vmem:[#allocation5 + $0x38] sm:$0xff] %v914
    %s924 = scalar_lea.vmem [#allocation2], 64
    %v925 = vld [vmem:[%s924] sm:$0xff]
    %v926 = vld [vmem:[%s924 + $0x8] sm:$0xff]
    %v927 = vld [vmem:[%s924 + $0x10] sm:$0xff]
    %v928 = vld [vmem:[%s924 + $0x18] sm:$0xff]
    %v929 = vld [vmem:[%s924 + $0x20] sm:$0xff]
    %v930 = vld [vmem:[%s924 + $0x28] sm:$0xff]
    %v931 = vld [vmem:[%s924 + $0x30] sm:$0xff]
    %v932 = vld [vmem:[%s924 + $0x38] sm:$0xff]
    %v933 = vpack.c.bf16 %v927, %v925
    %v934 = vpack.c.bf16 %v928, %v926
    %v935 = vpack.c.bf16 %v931, %v929
    %v936 = vpack.c.bf16 %v932, %v930
    %s937 = scalar_lea.vmem %s1, 8
    %v938 = vld [vmem:[%s937] sm:$0xff]
    %v939 = vpack.c.bf16 %v938, %v938
    %940 = vmatprep.subr.bf16.mxu0 %v934
    %941 = vmatpush1.bf16.msra.mxu0 %v933
    %942 = vmatprep.subr.bf16.mxu0 %v936
    %943 = vmatpush1.bf16.msra.mxu0 %v935
    %944 = vmatprep.subr.bf16.mxu0 0
    %945 = vmatpush1.bf16.msra.mxu0 0
    %946 = vmatprep.subr.bf16.mxu0 0
    %947 = vmatpush1.bf16.msra.mxu0 0
    %948 = vmatprep.subr.bf16.mxu0 0
    %949 = vmatpush1.bf16.msra.mxu0 0
    %950 = vmatprep.subr.bf16.mxu0 0
    %951 = vmatpush1.bf16.msra.mxu0 0
    %952 = vmatprep.subr.bf16.mxu0 0
    %953 = vmatpush1.bf16.msra.mxu0 0
    %954 = vmatprep.subr.bf16.mxu0 0
    %955 = vmatpush1.bf16.msra.mxu0 0
    %956 = vmatprep.subr.bf16.mxu0 0
    %957 = vmatpush1.bf16.msra.mxu0 0
    %958 = vmatprep.subr.bf16.mxu0 0
    %959 = vmatpush1.bf16.msra.mxu0 0
    %960 = vmatprep.subr.bf16.mxu0 0
    %961 = vmatpush1.bf16.msra.mxu0 0
    %962 = vmatprep.subr.bf16.mxu0 0
    %963 = vmatpush1.bf16.msra.mxu0 0
    %964 = vmatprep.subr.bf16.mxu0 0
    %965 = vmatpush1.bf16.msra.mxu0 0
    %966 = vmatprep.subr.bf16.mxu0 0
    %967 = vmatpush1.bf16.msra.mxu0 0
    %968 = vmatprep.subr.bf16.mxu0 0
    %969 = vmatpush1.bf16.msra.mxu0 0
    %970 = vmatprep.subr.bf16.mxu0 0
    %971 = vmatpush1.bf16.msra.mxu0 0
    %972 = vmatprep.mubr.bf16.mxu0 0
    %973 = vmatmul.mubr.bf16.gmra.mrb[0].mxu0 %v95
    %v974 = vpop.f32.mrb[0].mxu0
    %v975 = vadd.f32 %v70, %v974
    %v976 = vpop.f32.mrb[0].mxu0
    %v977 = vadd.f32 %v70, %v976
    %v978 = vpop.f32.mrb[0].mxu0
    %v979 = vadd.f32 %v75, %v978
    %v980 = vpop.f32.mrb[0].mxu0
    %v981 = vadd.f32 %v75, %v980
    %982 = vmatprep.mubr.bf16.mxu0 0
    %983 = vmatmul.mubr.bf16.gmra.mrb[0].mxu0 %v98
    %v984 = vpop.f32.mrb[0].mxu0
    %v985 = vadd.f32 %v80, %v984
    %v986 = vpop.f32.mrb[0].mxu0
    %v987 = vadd.f32 %v80, %v986
    %v988 = vpop.f32.mrb[0].mxu0
    %v989 = vadd.f32 %v85, %v988
    %v990 = vpop.f32.mrb[0].mxu0
    %v991 = vadd.f32 %v85, %v990
    %992 = vdwg.mxu0
    %v994 = vsel %vm153, %v939, 0
    %996 = vmatprep.subr.bf16.mxu0 0
    %997 = vmatpush1.bf16.xpose.msra.mxu0 %v158
    %998 = vmatprep.subr.bf16.mxu0 0
    %999 = vmatpush1.bf16.xpose.msra.mxu0 %v161
    %1000 = vmatprep.subr.bf16.mxu0 0
    %1001 = vmatpush1.bf16.xpose.msra.mxu0 0
    %1002 = vmatprep.subr.bf16.mxu0 0
    %1003 = vmatpush1.bf16.xpose.msra.mxu0 0
    %1004 = vmatprep.subr.bf16.mxu0 0
    %1005 = vmatpush1.bf16.xpose.msra.mxu0 0
    %1006 = vmatprep.subr.bf16.mxu0 0
    %1007 = vmatpush1.bf16.xpose.msra.mxu0 0
    %1008 = vmatprep.subr.bf16.mxu0 0
    %1009 = vmatpush1.bf16.xpose.msra.mxu0 0
    %1010 = vmatprep.subr.bf16.mxu0 0
    %1011 = vmatpush1.bf16.xpose.msra.mxu0 0
    %1012 = vmatprep.subr.bf16.mxu0 0
    %1013 = vmatpush1.bf16.xpose.msra.mxu0 0
    %1014 = vmatprep.subr.bf16.mxu0 0
    %1015 = vmatpush1.bf16.xpose.msra.mxu0 0
    %1016 = vmatprep.subr.bf16.mxu0 0
    %1017 = vmatpush1.bf16.xpose.msra.mxu0 0
    %1018 = vmatprep.subr.bf16.mxu0 0
    %1019 = vmatpush1.bf16.xpose.msra.mxu0 0
    %1020 = vmatprep.subr.bf16.mxu0 0
    %1021 = vmatpush1.bf16.xpose.msra.mxu0 0
    %1022 = vmatprep.subr.bf16.mxu0 0
    %1023 = vmatpush1.bf16.xpose.msra.mxu0 0
    %1024 = vmatprep.subr.bf16.mxu0 0
    %1025 = vmatpush1.bf16.xpose.msra.mxu0 0
    %1026 = vmatprep.subr.bf16.mxu0 0
    %1027 = vmatpush1.bf16.xpose.msra.mxu0 0
    %1028 = vmatprep.mubr.bf16.mxu0 0
    %1029 = vmatmul.mubr.bf16.gmra.mrb[0].mxu0 %v994
    %v1030 = vpop.f32.mrb[0].mxu0
    %v1031 = vadd.f32 0.0, %v1030
    %v1032 = vpop.f32.mrb[0].mxu0
    %v1033 = vpop.f32.mrb[0].mxu0
    %v1034 = vpop.f32.mrb[0].mxu0
    %1035 = vdwg.mxu0
    %1036 = vmatprep.subr.bf16.mxu0 0
    %1037 = vmatpush1.bf16.xpose.msra.mxu0 %v994
    %1038 = vmatprep.subr.bf16.mxu0 0
    %1039 = vmatpush1.bf16.xpose.msra.mxu0 0
    %1040 = vmatprep.subr.bf16.mxu0 0
    %1041 = vmatpush1.bf16.xpose.msra.mxu0 0
    %1042 = vmatprep.subr.bf16.mxu0 0
    %1043 = vmatpush1.bf16.xpose.msra.mxu0 0
    %1044 = vmatprep.subr.bf16.mxu0 0
    %1045 = vmatpush1.bf16.xpose.msra.mxu0 0
    %1046 = vmatprep.subr.bf16.mxu0 0
    %1047 = vmatpush1.bf16.xpose.msra.mxu0 0
    %1048 = vmatprep.subr.bf16.mxu0 0
    %1049 = vmatpush1.bf16.xpose.msra.mxu0 0
    %1050 = vmatprep.subr.bf16.mxu0 0
    %1051 = vmatpush1.bf16.xpose.msra.mxu0 0
    %1052 = vmatprep.subr.bf16.mxu0 0
    %1053 = vmatpush1.bf16.xpose.msra.mxu0 0
    %1054 = vmatprep.subr.bf16.mxu0 0
    %1055 = vmatpush1.bf16.xpose.msra.mxu0 0
    %1056 = vmatprep.subr.bf16.mxu0 0
    %1057 = vmatpush1.bf16.xpose.msra.mxu0 0
    %1058 = vmatprep.subr.bf16.mxu0 0
    %1059 = vmatpush1.bf16.xpose.msra.mxu0 0
    %1060 = vmatprep.subr.bf16.mxu0 0
    %1061 = vmatpush1.bf16.xpose.msra.mxu0 0
    %1062 = vmatprep.subr.bf16.mxu0 0
    %1063 = vmatpush1.bf16.xpose.msra.mxu0 0
    %1064 = vmatprep.subr.bf16.mxu0 0
    %1065 = vmatpush1.bf16.xpose.msra.mxu0 0
    %1066 = vmatprep.subr.bf16.mxu0 0
    %1067 = vmatpush1.bf16.xpose.msra.mxu0 0
    %1068 = vmatprep.mubr.bf16.mxu0 0
    %1069 = vmatmul.mubr.bf16.gmra.mrb[0].mxu0 %v210
    %v1070 = vpop.f32.mrb[0].mxu0
    %v1071 = vadd.f32 0.0, %v1070
    %v1072 = vpop.f32.mrb[0].mxu0
    %v1073 = vpop.f32.mrb[0].mxu0
    %v1074 = vadd.f32 0.0, %v1073
    %v1075 = vpop.f32.mrb[0].mxu0
    %1076 = vmatprep.mubr.bf16.mxu0 0
    %1077 = vmatmul.mubr.bf16.gmra.mrb[0].mxu0 %v213
    %v1078 = vpop.f32.mrb[0].mxu0
    %v1079 = vadd.f32 0.0, %v1078
    %v1080 = vpop.f32.mrb[0].mxu0
    %v1081 = vpop.f32.mrb[0].mxu0
    %v1082 = vadd.f32 0.0, %v1081
    %v1083 = vpop.f32.mrb[0].mxu0
    %1084 = vdwg.mxu0
    %v1085 = vmul.f32 %v1031, %v45
    %v1086 = vmul.f32 %v1031, %v46
    %v1087 = vmul.f32 %v1031, %v47
    %v1088 = vmul.f32 %v1031, %v48
    %v1089 = vmul.f32 %v1031, %v49
    %v1090 = vmul.f32 %v1031, %v50
    %v1091 = vmul.f32 %v1031, %v51
    %v1092 = vmul.f32 %v1031, %v52
    %1097 = vrot.lane.b32.xlu0 %v1071, 8
    %v1098 = vpop.permute.xlu0 %1097
    %1099 = vrot.lane.b32.xlu0 %v1074, 8
    %v1100 = vpop.permute.xlu0 %1099
    %1101 = vrot.lane.b32.xlu0 %v1079, 8
    %v1102 = vpop.permute.xlu0 %1101
    %1103 = vrot.lane.b32.xlu0 %v1082, 8
    %v1104 = vpop.permute.xlu0 %1103
    %1109 = vrot.lane.b32.xlu0 %v1071, 16
    %v1110 = vpop.permute.xlu0 %1109
    %1111 = vrot.lane.b32.xlu0 %v1074, 16
    %v1112 = vpop.permute.xlu0 %1111
    %1113 = vrot.lane.b32.xlu0 %v1079, 16
    %v1114 = vpop.permute.xlu0 %1113
    %1115 = vrot.lane.b32.xlu0 %v1082, 16
    %v1116 = vpop.permute.xlu0 %1115
    %1121 = vrot.lane.b32.xlu0 %v1071, 24
    %v1122 = vpop.permute.xlu0 %1121
    %1123 = vrot.lane.b32.xlu0 %v1074, 24
    %v1124 = vpop.permute.xlu0 %1123
    %1125 = vrot.lane.b32.xlu0 %v1079, 24
    %v1126 = vpop.permute.xlu0 %1125
    %1127 = vrot.lane.b32.xlu0 %v1082, 24
    %v1128 = vpop.permute.xlu0 %1127
    %1133 = vrot.lane.b32.xlu0 %v1071, 32
    %v1134 = vpop.permute.xlu0 %1133
    %1135 = vrot.lane.b32.xlu0 %v1074, 32
    %v1136 = vpop.permute.xlu0 %1135
    %1137 = vrot.lane.b32.xlu0 %v1079, 32
    %v1138 = vpop.permute.xlu0 %1137
    %1139 = vrot.lane.b32.xlu0 %v1082, 32
    %v1140 = vpop.permute.xlu0 %1139
    %1145 = vrot.lane.b32.xlu0 %v1071, 40
    %v1146 = vpop.permute.xlu0 %1145
    %1147 = vrot.lane.b32.xlu0 %v1074, 40
    %v1148 = vpop.permute.xlu0 %1147
    %1149 = vrot.lane.b32.xlu0 %v1079, 40
    %v1150 = vpop.permute.xlu0 %1149
    %1151 = vrot.lane.b32.xlu0 %v1082, 40
    %v1152 = vpop.permute.xlu0 %1151
    %1157 = vrot.lane.b32.xlu0 %v1071, 48
    %v1158 = vpop.permute.xlu0 %1157
    %1159 = vrot.lane.b32.xlu0 %v1074, 48
    %v1160 = vpop.permute.xlu0 %1159
    %1161 = vrot.lane.b32.xlu0 %v1079, 48
    %v1162 = vpop.permute.xlu0 %1161
    %1163 = vrot.lane.b32.xlu0 %v1082, 48
    %v1164 = vpop.permute.xlu0 %1163
    %1169 = vrot.lane.b32.xlu0 %v1071, 56
    %v1170 = vpop.permute.xlu0 %1169
    %1171 = vrot.lane.b32.xlu0 %v1074, 56
    %v1172 = vpop.permute.xlu0 %1171
    %1173 = vrot.lane.b32.xlu0 %v1079, 56
    %v1174 = vpop.permute.xlu0 %1173
    %1175 = vrot.lane.b32.xlu0 %v1082, 56
    %v1176 = vpop.permute.xlu0 %1175
    %v1181 = vsel %vm360, %v1071, %v1098
    %v1182 = vsel %vm360, %v1074, %v1100
    %v1183 = vsel %vm360, %v1079, %v1102
    %v1184 = vsel %vm360, %v1082, %v1104
    %v1185 = vsel %vm365, %v1181, %v1110
    %v1186 = vsel %vm365, %v1182, %v1112
    %v1187 = vsel %vm365, %v1183, %v1114
    %v1188 = vsel %vm365, %v1184, %v1116
    %v1189 = vsel %vm370, %v1185, %v1122
    %v1190 = vsel %vm370, %v1186, %v1124
    %v1191 = vsel %vm370, %v1187, %v1126
    %v1192 = vsel %vm370, %v1188, %v1128
    %v1193 = vsel %vm93, %v1189, %v1134
    %v1194 = vsel %vm93, %v1190, %v1136
    %v1195 = vsel %vm93, %v1191, %v1138
    %v1196 = vsel %vm93, %v1192, %v1140
    %v1197 = vsel %vm379, %v1193, %v1146
    %v1198 = vsel %vm379, %v1194, %v1148
    %v1199 = vsel %vm379, %v1195, %v1150
    %v1200 = vsel %vm379, %v1196, %v1152
    %v1201 = vsel %vm384, %v1197, %v1158
    %v1202 = vsel %vm384, %v1198, %v1160
    %v1203 = vsel %vm384, %v1199, %v1162
    %v1204 = vsel %vm384, %v1200, %v1164
    %v1205 = vsel %vm389, %v1201, %v1170
    %v1206 = vsel %vm389, %v1202, %v1172
    %v1207 = vsel %vm389, %v1203, %v1174
    %v1208 = vsel %vm389, %v1204, %v1176
    %v1209 = vmul.f32 %v1205, %v33
    %v1210 = vmul.f32 %v1206, %v34
    %v1211 = vmul.f32 %v1207, %v35
    %v1212 = vmul.f32 %v1208, %v36
    %v1213 = vpack.c.bf16 %v1086, %v1085
    %v1214 = vpack.c.bf16 %v1088, %v1087
    %v1215 = vpack.c.bf16 %v1090, %v1089
    %v1216 = vpack.c.bf16 %v1092, %v1091
    %v1217 = vpack.c.bf16 %v979, %v975
    %v1218 = vpack.c.bf16 %v981, %v977
    %v1219 = vpack.c.bf16 %v989, %v985
    %v1220 = vpack.c.bf16 %v991, %v987
    %v1222 = vsel %vm93, %v1213, 0
    %v1225 = vsel %vm93, %v1214, 0
    %v1228 = vsel %vm93, %v1215, 0
    %v1231 = vsel %vm93, %v1216, 0
    %1233 = vmatprep.subr.bf16.mxu0 %v1218
    %1234 = vmatpush1.bf16.msra.mxu0 %v1217
    %1235 = vmatprep.subr.bf16.mxu0 %v1220
    %1236 = vmatpush1.bf16.msra.mxu0 %v1219
    %1237 = vmatprep.subr.bf16.mxu0 0
    %1238 = vmatpush1.bf16.msra.mxu0 0
    %1239 = vmatprep.subr.bf16.mxu0 0
    %1240 = vmatpush1.bf16.msra.mxu0 0
    %1241 = vmatprep.subr.bf16.mxu0 0
    %1242 = vmatpush1.bf16.msra.mxu0 0
    %1243 = vmatprep.subr.bf16.mxu0 0
    %1244 = vmatpush1.bf16.msra.mxu0 0
    %1245 = vmatprep.subr.bf16.mxu0 0
    %1246 = vmatpush1.bf16.msra.mxu0 0
    %1247 = vmatprep.subr.bf16.mxu0 0
    %1248 = vmatpush1.bf16.msra.mxu0 0
    %1249 = vmatprep.subr.bf16.mxu0 0
    %1250 = vmatpush1.bf16.msra.mxu0 0
    %1251 = vmatprep.subr.bf16.mxu0 0
    %1252 = vmatpush1.bf16.msra.mxu0 0
    %1253 = vmatprep.subr.bf16.mxu0 0
    %1254 = vmatpush1.bf16.msra.mxu0 0
    %1255 = vmatprep.subr.bf16.mxu0 0
    %1256 = vmatpush1.bf16.msra.mxu0 0
    %1257 = vmatprep.subr.bf16.mxu0 0
    %1258 = vmatpush1.bf16.msra.mxu0 0
    %1259 = vmatprep.subr.bf16.mxu0 0
    %1260 = vmatpush1.bf16.msra.mxu0 0
    %1261 = vmatprep.subr.bf16.mxu0 0
    %1262 = vmatpush1.bf16.msra.mxu0 0
    %1263 = vmatprep.subr.bf16.mxu0 0
    %1264 = vmatpush1.bf16.msra.mxu0 0
    %1265 = vmatprep.mubr.bf16.mxu0 0
    %1266 = vmatmul.mubr.bf16.gmra.mrb[0].mxu0 %v1222
    %v1267 = vpop.f32.mrb[0].mxu0
    %v1268 = vadd.f32 0.0, %v1267
    %v1269 = vpop.f32.mrb[0].mxu0
    %v1270 = vadd.f32 0.0, %v1269
    %v1271 = vpop.f32.mrb[0].mxu0
    %v1272 = vadd.f32 0.0, %v1271
    %v1273 = vpop.f32.mrb[0].mxu0
    %v1274 = vadd.f32 0.0, %v1273
    %1275 = vmatprep.mubr.bf16.mxu0 0
    %1276 = vmatmul.mubr.bf16.gmra.mrb[0].mxu0 %v1225
    %v1277 = vpop.f32.mrb[0].mxu0
    %v1278 = vadd.f32 0.0, %v1277
    %v1279 = vpop.f32.mrb[0].mxu0
    %v1280 = vadd.f32 0.0, %v1279
    %v1281 = vpop.f32.mrb[0].mxu0
    %v1282 = vadd.f32 0.0, %v1281
    %v1283 = vpop.f32.mrb[0].mxu0
    %v1284 = vadd.f32 0.0, %v1283
    %1285 = vmatprep.mubr.bf16.mxu0 0
    %1286 = vmatmul.mubr.bf16.gmra.mrb[0].mxu0 %v1228
    %v1287 = vpop.f32.mrb[0].mxu0
    %v1288 = vadd.f32 0.0, %v1287
    %v1289 = vpop.f32.mrb[0].mxu0
    %v1290 = vadd.f32 0.0, %v1289
    %v1291 = vpop.f32.mrb[0].mxu0
    %v1292 = vadd.f32 0.0, %v1291
    %v1293 = vpop.f32.mrb[0].mxu0
    %v1294 = vadd.f32 0.0, %v1293
    %1295 = vmatprep.mubr.bf16.mxu0 0
    %1296 = vmatmul.mubr.bf16.gmra.mrb[0].mxu0 %v1231
    %v1297 = vpop.f32.mrb[0].mxu0
    %v1298 = vadd.f32 0.0, %v1297
    %v1299 = vpop.f32.mrb[0].mxu0
    %v1300 = vadd.f32 0.0, %v1299
    %v1301 = vpop.f32.mrb[0].mxu0
    %v1302 = vadd.f32 0.0, %v1301
    %v1303 = vpop.f32.mrb[0].mxu0
    %v1304 = vadd.f32 0.0, %v1303
    %1305 = vdwg.mxu0
    %v1306 = vrot.slane %v1268, 4
    %v1307 = vmax.f32 %v1268, %v1306
    %v1308 = vrot.slane %v1307, 2
    %v1309 = vmax.f32 %v1307, %v1308
    %v1310 = vrot.slane %v1309, 1
    %v1311 = vmax.f32 %v1309, %v1310
    %v1312 = vrot.slane %v1270, 4
    %v1313 = vmax.f32 %v1270, %v1312
    %v1314 = vrot.slane %v1313, 2
    %v1315 = vmax.f32 %v1313, %v1314
    %v1316 = vrot.slane %v1315, 1
    %v1317 = vmax.f32 %v1315, %v1316
    %v1318 = vsub.f32 %v1268, %v1311
    %v1319 = vsub.f32 %v1270, %v1317
    %v1320 = vmul.f32 %v1318, 1.442695
    %v1321 = vpow.pop %v1320
    %v1322 = vmul.f32 %v1319, 1.442695
    %v1323 = vpow.pop %v1322
    %v1324 = vrot.slane %v1321, 4
    %v1325 = vadd.f32 %v1321, %v1324
    %v1326 = vrot.slane %v1325, 2
    %v1327 = vadd.f32 %v1325, %v1326
    %v1328 = vrot.slane %v1327, 1
    %v1329 = vadd.f32 %v1327, %v1328
    %v1330 = vrot.slane %v1323, 4
    %v1331 = vadd.f32 %v1323, %v1330
    %v1332 = vrot.slane %v1331, 2
    %v1333 = vadd.f32 %v1331, %v1332
    %v1334 = vrot.slane %v1333, 1
    %v1335 = vadd.f32 %v1333, %v1334
    %v1336 = vrcp.pop %v1329
    %v1337 = vrcp.pop %v1335
    %v1338 = vmul.f32 %v1321, %v1336
    %v1339 = vmul.f32 %v1323, %v1337
    %v1340 = vrot.slane %v1272, 4
    %v1341 = vmax.f32 %v1272, %v1340
    %v1342 = vrot.slane %v1341, 2
    %v1343 = vmax.f32 %v1341, %v1342
    %v1344 = vrot.slane %v1343, 1
    %v1345 = vmax.f32 %v1343, %v1344
    %v1346 = vrot.slane %v1274, 4
    %v1347 = vmax.f32 %v1274, %v1346
    %v1348 = vrot.slane %v1347, 2
    %v1349 = vmax.f32 %v1347, %v1348
    %v1350 = vrot.slane %v1349, 1
    %v1351 = vmax.f32 %v1349, %v1350
    %v1352 = vsub.f32 %v1272, %v1345
    %v1353 = vsub.f32 %v1274, %v1351
    %v1354 = vmul.f32 %v1352, 1.442695
    %v1355 = vpow.pop %v1354
    %v1356 = vmul.f32 %v1353, 1.442695
    %v1357 = vpow.pop %v1356
    %v1358 = vrot.slane %v1355, 4
    %v1359 = vadd.f32 %v1355, %v1358
    %v1360 = vrot.slane %v1359, 2
    %v1361 = vadd.f32 %v1359, %v1360
    %v1362 = vrot.slane %v1361, 1
    %v1363 = vadd.f32 %v1361, %v1362
    %v1364 = vrot.slane %v1357, 4
    %v1365 = vadd.f32 %v1357, %v1364
    %v1366 = vrot.slane %v1365, 2
    %v1367 = vadd.f32 %v1365, %v1366
    %v1368 = vrot.slane %v1367, 1
    %v1369 = vadd.f32 %v1367, %v1368
    %v1370 = vrcp.pop %v1363
    %v1371 = vrcp.pop %v1369
    %v1372 = vmul.f32 %v1355, %v1370
    %v1373 = vmul.f32 %v1357, %v1371
    %v1374 = vrot.slane %v1278, 4
    %v1375 = vmax.f32 %v1278, %v1374
    %v1376 = vrot.slane %v1375, 2
    %v1377 = vmax.f32 %v1375, %v1376
    %v1378 = vrot.slane %v1377, 1
    %v1379 = vmax.f32 %v1377, %v1378
    %v1380 = vrot.slane %v1280, 4
    %v1381 = vmax.f32 %v1280, %v1380
    %v1382 = vrot.slane %v1381, 2
    %v1383 = vmax.f32 %v1381, %v1382
    %v1384 = vrot.slane %v1383, 1
    %v1385 = vmax.f32 %v1383, %v1384
    %v1386 = vsub.f32 %v1278, %v1379
    %v1387 = vsub.f32 %v1280, %v1385
    %v1388 = vmul.f32 %v1386, 1.442695
    %v1389 = vpow.pop %v1388
    %v1390 = vmul.f32 %v1387, 1.442695
    %v1391 = vpow.pop %v1390
    %v1392 = vrot.slane %v1389, 4
    %v1393 = vadd.f32 %v1389, %v1392
    %v1394 = vrot.slane %v1393, 2
    %v1395 = vadd.f32 %v1393, %v1394
    %v1396 = vrot.slane %v1395, 1
    %v1397 = vadd.f32 %v1395, %v1396
    %v1398 = vrot.slane %v1391, 4
    %v1399 = vadd.f32 %v1391, %v1398
    %v1400 = vrot.slane %v1399, 2
    %v1401 = vadd.f32 %v1399, %v1400
    %v1402 = vrot.slane %v1401, 1
    %v1403 = vadd.f32 %v1401, %v1402
    %v1404 = vrcp.pop %v1397
    %v1405 = vrcp.pop %v1403
    %v1406 = vmul.f32 %v1389, %v1404
    %v1407 = vmul.f32 %v1391, %v1405
    %v1408 = vrot.slane %v1282, 4
    %v1409 = vmax.f32 %v1282, %v1408
    %v1410 = vrot.slane %v1409, 2
    %v1411 = vmax.f32 %v1409, %v1410
    %v1412 = vrot.slane %v1411, 1
    %v1413 = vmax.f32 %v1411, %v1412
    %v1414 = vrot.slane %v1284, 4
    %v1415 = vmax.f32 %v1284, %v1414
    %v1416 = vrot.slane %v1415, 2
    %v1417 = vmax.f32 %v1415, %v1416
    %v1418 = vrot.slane %v1417, 1
    %v1419 = vmax.f32 %v1417, %v1418
    %v1420 = vsub.f32 %v1282, %v1413
    %v1421 = vsub.f32 %v1284, %v1419
    %v1422 = vmul.f32 %v1420, 1.442695
    %v1423 = vpow.pop %v1422
    %v1424 = vmul.f32 %v1421, 1.442695
    %v1425 = vpow.pop %v1424
    %v1426 = vrot.slane %v1423, 4
    %v1427 = vadd.f32 %v1423, %v1426
    %v1428 = vrot.slane %v1427, 2
    %v1429 = vadd.f32 %v1427, %v1428
    %v1430 = vrot.slane %v1429, 1
    %v1431 = vadd.f32 %v1429, %v1430
    %v1432 = vrot.slane %v1425, 4
    %v1433 = vadd.f32 %v1425, %v1432
    %v1434 = vrot.slane %v1433, 2
    %v1435 = vadd.f32 %v1433, %v1434
    %v1436 = vrot.slane %v1435, 1
    %v1437 = vadd.f32 %v1435, %v1436
    %v1438 = vrcp.pop %v1431
    %v1439 = vrcp.pop %v1437
    %v1440 = vmul.f32 %v1423, %v1438
    %v1441 = vmul.f32 %v1425, %v1439
    %v1442 = vrot.slane %v1288, 4
    %v1443 = vmax.f32 %v1288, %v1442
    %v1444 = vrot.slane %v1443, 2
    %v1445 = vmax.f32 %v1443, %v1444
    %v1446 = vrot.slane %v1445, 1
    %v1447 = vmax.f32 %v1445, %v1446
    %v1448 = vrot.slane %v1290, 4
    %v1449 = vmax.f32 %v1290, %v1448
    %v1450 = vrot.slane %v1449, 2
    %v1451 = vmax.f32 %v1449, %v1450
    %v1452 = vrot.slane %v1451, 1
    %v1453 = vmax.f32 %v1451, %v1452
    %v1454 = vsub.f32 %v1288, %v1447
    %v1455 = vsub.f32 %v1290, %v1453
    %v1456 = vmul.f32 %v1454, 1.442695
    %v1457 = vpow.pop %v1456
    %v1458 = vmul.f32 %v1455, 1.442695
    %v1459 = vpow.pop %v1458
    %v1460 = vrot.slane %v1457, 4
    %v1461 = vadd.f32 %v1457, %v1460
    %v1462 = vrot.slane %v1461, 2
    %v1463 = vadd.f32 %v1461, %v1462
    %v1464 = vrot.slane %v1463, 1
    %v1465 = vadd.f32 %v1463, %v1464
    %v1466 = vrot.slane %v1459, 4
    %v1467 = vadd.f32 %v1459, %v1466
    %v1468 = vrot.slane %v1467, 2
    %v1469 = vadd.f32 %v1467, %v1468
    %v1470 = vrot.slane %v1469, 1
    %v1471 = vadd.f32 %v1469, %v1470
    %v1472 = vrcp.pop %v1465
    %v1473 = vrcp.pop %v1471
    %v1474 = vmul.f32 %v1457, %v1472
    %v1475 = vmul.f32 %v1459, %v1473
    %v1476 = vrot.slane %v1292, 4
    %v1477 = vmax.f32 %v1292, %v1476
    %v1478 = vrot.slane %v1477, 2
    %v1479 = vmax.f32 %v1477, %v1478
    %v1480 = vrot.slane %v1479, 1
    %v1481 = vmax.f32 %v1479, %v1480
    %v1482 = vrot.slane %v1294, 4
    %v1483 = vmax.f32 %v1294, %v1482
    %v1484 = vrot.slane %v1483, 2
    %v1485 = vmax.f32 %v1483, %v1484
    %v1486 = vrot.slane %v1485, 1
    %v1487 = vmax.f32 %v1485, %v1486
    %v1488 = vsub.f32 %v1292, %v1481
    %v1489 = vsub.f32 %v1294, %v1487
    %v1490 = vmul.f32 %v1488, 1.442695
    %v1491 = vpow.pop %v1490
    %v1492 = vmul.f32 %v1489, 1.442695
    %v1493 = vpow.pop %v1492
    %v1494 = vrot.slane %v1491, 4
    %v1495 = vadd.f32 %v1491, %v1494
    %v1496 = vrot.slane %v1495, 2
    %v1497 = vadd.f32 %v1495, %v1496
    %v1498 = vrot.slane %v1497, 1
    %v1499 = vadd.f32 %v1497, %v1498
    %v1500 = vrot.slane %v1493, 4
    %v1501 = vadd.f32 %v1493, %v1500
    %v1502 = vrot.slane %v1501, 2
    %v1503 = vadd.f32 %v1501, %v1502
    %v1504 = vrot.slane %v1503, 1
    %v1505 = vadd.f32 %v1503, %v1504
    %v1506 = vrcp.pop %v1499
    %v1507 = vrcp.pop %v1505
    %v1508 = vmul.f32 %v1491, %v1506
    %v1509 = vmul.f32 %v1493, %v1507
    %v1510 = vrot.slane %v1298, 4
    %v1511 = vmax.f32 %v1298, %v1510
    %v1512 = vrot.slane %v1511, 2
    %v1513 = vmax.f32 %v1511, %v1512
    %v1514 = vrot.slane %v1513, 1
    %v1515 = vmax.f32 %v1513, %v1514
    %v1516 = vrot.slane %v1300, 4
    %v1517 = vmax.f32 %v1300, %v1516
    %v1518 = vrot.slane %v1517, 2
    %v1519 = vmax.f32 %v1517, %v1518
    %v1520 = vrot.slane %v1519, 1
    %v1521 = vmax.f32 %v1519, %v1520
    %v1522 = vsub.f32 %v1298, %v1515
    %v1523 = vsub.f32 %v1300, %v1521
    %v1524 = vmul.f32 %v1522, 1.442695
    %v1525 = vpow.pop %v1524
    %v1526 = vmul.f32 %v1523, 1.442695
    %v1527 = vpow.pop %v1526
    %v1528 = vrot.slane %v1525, 4
    %v1529 = vadd.f32 %v1525, %v1528
    %v1530 = vrot.slane %v1529, 2
    %v1531 = vadd.f32 %v1529, %v1530
    %v1532 = vrot.slane %v1531, 1
    %v1533 = vadd.f32 %v1531, %v1532
    %v1534 = vrot.slane %v1527, 4
    %v1535 = vadd.f32 %v1527, %v1534
    %v1536 = vrot.slane %v1535, 2
    %v1537 = vadd.f32 %v1535, %v1536
    %v1538 = vrot.slane %v1537, 1
    %v1539 = vadd.f32 %v1537, %v1538
    %v1540 = vrcp.pop %v1533
    %v1541 = vrcp.pop %v1539
    %v1542 = vmul.f32 %v1525, %v1540
    %v1543 = vmul.f32 %v1527, %v1541
    %v1544 = vrot.slane %v1302, 4
    %v1545 = vmax.f32 %v1302, %v1544
    %v1546 = vrot.slane %v1545, 2
    %v1547 = vmax.f32 %v1545, %v1546
    %v1548 = vrot.slane %v1547, 1
    %v1549 = vmax.f32 %v1547, %v1548
    %v1550 = vrot.slane %v1304, 4
    %v1551 = vmax.f32 %v1304, %v1550
    %v1552 = vrot.slane %v1551, 2
    %v1553 = vmax.f32 %v1551, %v1552
    %v1554 = vrot.slane %v1553, 1
    %v1555 = vmax.f32 %v1553, %v1554
    %v1556 = vsub.f32 %v1302, %v1549
    %v1557 = vsub.f32 %v1304, %v1555
    %v1558 = vmul.f32 %v1556, 1.442695
    %v1559 = vpow.pop %v1558
    %v1560 = vmul.f32 %v1557, 1.442695
    %v1561 = vpow.pop %v1560
    %v1562 = vrot.slane %v1559, 4
    %v1563 = vadd.f32 %v1559, %v1562
    %v1564 = vrot.slane %v1563, 2
    %v1565 = vadd.f32 %v1563, %v1564
    %v1566 = vrot.slane %v1565, 1
    %v1567 = vadd.f32 %v1565, %v1566
    %v1568 = vrot.slane %v1561, 4
    %v1569 = vadd.f32 %v1561, %v1568
    %v1570 = vrot.slane %v1569, 2
    %v1571 = vadd.f32 %v1569, %v1570
    %v1572 = vrot.slane %v1571, 1
    %v1573 = vadd.f32 %v1571, %v1572
    %v1574 = vrcp.pop %v1567
    %v1575 = vrcp.pop %v1573
    %v1576 = vmul.f32 %v1559, %v1574
    %v1577 = vmul.f32 %v1561, %v1575
    %v1578 = vpack.c.bf16 %v1372, %v1338
    %v1579 = vpack.c.bf16 %v1373, %v1339
    %v1580 = vpack.c.bf16 %v1440, %v1406
    %v1581 = vpack.c.bf16 %v1441, %v1407
    %v1582 = vpack.c.bf16 %v1508, %v1474
    %v1583 = vpack.c.bf16 %v1509, %v1475
    %v1584 = vpack.c.bf16 %v1576, %v1542
    %v1585 = vpack.c.bf16 %v1577, %v1543
    %v1586 = vpack.c.bf16 %v1210, %v1209
    %v1587 = vpack.c.bf16 %v1212, %v1211
    %v1589 = vsel %vm773, %v1586, 0
    %v1592 = vsel %vm773, %v1587, 0
    %1594 = vmatprep.subr.bf16.mxu0 %v1579
    %1595 = vmatpush1.bf16.msra.mxu0 %v1578
    %1596 = vmatprep.subr.bf16.mxu0 %v1581
    %1597 = vmatpush1.bf16.msra.mxu0 %v1580
    %1598 = vmatprep.subr.bf16.mxu0 %v1583
    %1599 = vmatpush1.bf16.msra.mxu0 %v1582
    %1600 = vmatprep.subr.bf16.mxu0 %v1585
    %1601 = vmatpush1.bf16.msra.mxu0 %v1584
    %1602 = vmatprep.subr.bf16.mxu0 0
    %1603 = vmatpush1.bf16.msra.mxu0 0
    %1604 = vmatprep.subr.bf16.mxu0 0
    %1605 = vmatpush1.bf16.msra.mxu0 0
    %1606 = vmatprep.subr.bf16.mxu0 0
    %1607 = vmatpush1.bf16.msra.mxu0 0
    %1608 = vmatprep.subr.bf16.mxu0 0
    %1609 = vmatpush1.bf16.msra.mxu0 0
    %1610 = vmatprep.subr.bf16.mxu0 0
    %1611 = vmatpush1.bf16.msra.mxu0 0
    %1612 = vmatprep.subr.bf16.mxu0 0
    %1613 = vmatpush1.bf16.msra.mxu0 0
    %1614 = vmatprep.subr.bf16.mxu0 0
    %1615 = vmatpush1.bf16.msra.mxu0 0
    %1616 = vmatprep.subr.bf16.mxu0 0
    %1617 = vmatpush1.bf16.msra.mxu0 0
    %1618 = vmatprep.subr.bf16.mxu0 0
    %1619 = vmatpush1.bf16.msra.mxu0 0
    %1620 = vmatprep.subr.bf16.mxu0 0
    %1621 = vmatpush1.bf16.msra.mxu0 0
    %1622 = vmatprep.subr.bf16.mxu0 0
    %1623 = vmatpush1.bf16.msra.mxu0 0
    %1624 = vmatprep.subr.bf16.mxu0 0
    %1625 = vmatpush1.bf16.msra.mxu0 0
    %1626 = vmatprep.mubr.bf16.mxu0 0
    %1627 = vmatmul.mubr.bf16.gmra.mrb[0].mxu0 %v1589
    %v1628 = vpop.f32.mrb[0].mxu0
    %v1629 = vadd.f32 0.0, %v1628
    %v1630 = vpop.f32.mrb[0].mxu0
    %v1631 = vadd.f32 0.0, %v1630
    %v1632 = vpop.f32.mrb[0].mxu0
    %v1633 = vadd.f32 0.0, %v1632
    %v1634 = vpop.f32.mrb[0].mxu0
    %v1635 = vadd.f32 0.0, %v1634
    %1636 = vmatprep.mubr.bf16.mxu0 0
    %1637 = vmatmul.mubr.bf16.gmra.mrb[0].mxu0 %v1592
    %v1638 = vpop.f32.mrb[0].mxu0
    %v1639 = vadd.f32 0.0, %v1638
    %v1640 = vpop.f32.mrb[0].mxu0
    %v1641 = vadd.f32 0.0, %v1640
    %v1642 = vpop.f32.mrb[0].mxu0
    %v1643 = vadd.f32 0.0, %v1642
    %v1644 = vpop.f32.mrb[0].mxu0
    %v1645 = vadd.f32 0.0, %v1644
    %1646 = vdwg.mxu0
    %v1647 = vpack.c.bf16 %v1633, %v1629
    %v1648 = vpack.c.bf16 %v1635, %v1631
    %v1649 = vpack.c.bf16 %v1643, %v1639
    %v1650 = vpack.c.bf16 %v1645, %v1641
    %1651 = vmatprep.subr.bf16.mxu0 %v1648
    %1652 = vmatpush1.bf16.msra.mxu0 %v1647
    %1653 = vmatprep.subr.bf16.mxu0 %v1650
    %1654 = vmatpush1.bf16.msra.mxu0 %v1649
    %1655 = vmatprep.subr.bf16.mxu0 0
    %1656 = vmatpush1.bf16.msra.mxu0 0
    %1657 = vmatprep.subr.bf16.mxu0 0
    %1658 = vmatpush1.bf16.msra.mxu0 0
    %1659 = vmatprep.subr.bf16.mxu0 0
    %1660 = vmatpush1.bf16.msra.mxu0 0
    %1661 = vmatprep.subr.bf16.mxu0 0
    %1662 = vmatpush1.bf16.msra.mxu0 0
    %1663 = vmatprep.subr.bf16.mxu0 0
    %1664 = vmatpush1.bf16.msra.mxu0 0
    %1665 = vmatprep.subr.bf16.mxu0 0
    %1666 = vmatpush1.bf16.msra.mxu0 0
    %1667 = vmatprep.subr.bf16.mxu0 0
    %1668 = vmatpush1.bf16.msra.mxu0 0
    %1669 = vmatprep.subr.bf16.mxu0 0
    %1670 = vmatpush1.bf16.msra.mxu0 0
    %1671 = vmatprep.subr.bf16.mxu0 0
    %1672 = vmatpush1.bf16.msra.mxu0 0
    %1673 = vmatprep.subr.bf16.mxu0 0
    %1674 = vmatpush1.bf16.msra.mxu0 0
    %1675 = vmatprep.subr.bf16.mxu0 0
    %1676 = vmatpush1.bf16.msra.mxu0 0
    %1677 = vmatprep.subr.bf16.mxu0 0
    %1678 = vmatpush1.bf16.msra.mxu0 0
    %1679 = vmatprep.subr.bf16.mxu0 0
    %1680 = vmatpush1.bf16.msra.mxu0 0
    %1681 = vmatprep.subr.bf16.mxu0 0
    %1682 = vmatpush1.bf16.msra.mxu0 0
    %1683 = vmatprep.mubr.bf16.mxu0 0
    %1684 = vmatmul.mubr.bf16.gmra.mrb[0].mxu0 %v858
    %v1685 = vpop.f32.mrb[0].mxu0
    %v1686 = vadd.f32 %v839, %v1685
    %v1687 = vpop.f32.mrb[0].mxu0
    %v1688 = vadd.f32 %v839, %v1687
    %v1689 = vpop.f32.mrb[0].mxu0
    %v1690 = vadd.f32 %v843, %v1689
    %v1691 = vpop.f32.mrb[0].mxu0
    %v1692 = vadd.f32 %v843, %v1691
    %1693 = vmatprep.mubr.bf16.mxu0 0
    %1694 = vmatmul.mubr.bf16.gmra.mrb[0].mxu0 %v861
    %v1695 = vpop.f32.mrb[0].mxu0
    %v1696 = vadd.f32 %v847, %v1695
    %v1697 = vpop.f32.mrb[0].mxu0
    %v1698 = vadd.f32 %v847, %v1697
    %v1699 = vpop.f32.mrb[0].mxu0
    %v1700 = vadd.f32 %v851, %v1699
    %v1701 = vpop.f32.mrb[0].mxu0
    %v1702 = vadd.f32 %v851, %v1701
    %1703 = vdwg.mxu0
    %s1704 = scalar_lea.vmem [#allocation5], 64
    %1705 = vst [vmem:[%s1704] sm:$0xff] %v1686
    %1706 = vst [vmem:[%s1704 + $0x8] sm:$0xff] %v1688
    %1707 = vst [vmem:[%s1704 + $0x10] sm:$0xff] %v1690
    %1708 = vst [vmem:[%s1704 + $0x18] sm:$0xff] %v1692
    %1709 = vst [vmem:[%s1704 + $0x20] sm:$0xff] %v1696
    %1710 = vst [vmem:[%s1704 + $0x28] sm:$0xff] %v1698
    %1711 = vst [vmem:[%s1704 + $0x30] sm:$0xff] %v1700
    %1712 = vst [vmem:[%s1704 + $0x38] sm:$0xff] %v1702
    // Predicated region
    $region22: #{tpu_custom_call.1} parent=1 // pred_check
      _
    $region23: #{tpu_custom_call.1} parent=1 // pred_check_branch
      %1714 = sbr.rel (0) target = $region25
    $region24: #{tpu_custom_call.1} parent=1 // pred_region
      %s1716 = ssub.s32 2048, 2048
      %1717 = vsyncadd [#allocation4], %s1716
      %s1718 = sshll.u32 [#allocation5], 4
      %s1719 = int_to_ptr.vmem [resolvable:$true] %s1718
      %1724 = dma.vmem_to_hbm [thread:$0]  %s1719, 2048, %s4, [#allocation4], 256, 256, 16
    $region25: #{tpu_custom_call.1} parent=1 // pred_fallthru
      _
    // Predicated region
    $region26: #{tpu_custom_call.1} parent=1 // pred_check
      _
    $region27: #{tpu_custom_call.1} parent=1 // pred_check_branch
      %1726 = sbr.rel (0) target = $region29
    $region28: #{tpu_custom_call.1} parent=1 // pred_region
      %1727 = dma.done [#allocation4], 2048
    $region29: #{tpu_custom_call.1} parent=1 // pred_fallthru
      _
    %1728 = vsyncpa [#allocation3], 1
    %1729 = vsyncpa [#allocation4], 1

</llo_original>
